<compile_context>
chip_gen: v7x
topology: tpu7x:2x2x1
jax: 0.10.0
libtpu: 0.0.40
codegen_flags: <defaults>
</compile_context>

<pallas_src>
import functools
import math

import jax
import jax.numpy as jnp
from jax.experimental import pallas as pl
from jax.experimental.pallas import tpu as pltpu


# ---------------------------------------------------------------------------
# Shared math helpers
# ---------------------------------------------------------------------------
def _layernorm(x, gamma, beta, eps=1e-5):
    mu = jnp.mean(x, axis=-1, keepdims=True)
    var = jnp.mean((x - mu) ** 2, axis=-1, keepdims=True)
    return (x - mu) * jax.lax.rsqrt(var + eps) * gamma + beta


# ---------------------------------------------------------------------------
# Kernel
# ---------------------------------------------------------------------------
_BIAS_ORDER = ("bq", "bk", "bv", "bo", "ln1_g", "ln1_b", "b1", "b2", "ln2_g", "ln2_b")
_B_LAYER_ROWS = 16  # per-layer row budget in the bias slab (10 used, 8-row aligned)


def transformer_kernel(x_ref, w_ref, b_ref, o_ref, *,
                       num_heads, num_layers, S, H, F,
                       w_layer_rows, b_layer_rows, b_layer_base):
    hd = H // num_heads
    scale = 1.0 / math.sqrt(hd)

    # Head-membership mask built in-kernel (no operand / DMA):
    #   maskT[h, d] = 1.0 iff feature d belongs to head h.
    d_idx = jax.lax.broadcasted_iota(jnp.int32, (num_heads, H), 1)
    h_idx = jax.lax.broadcasted_iota(jnp.int32, (num_heads, H), 0)
    maskT = ((d_idx >= h_idx * hd) & (d_idx < (h_idx + 1) * hd)).astype(jnp.float32)
    maskT_scaled = maskT * scale

    # positional-encoding add (dropout = 0 -> identity); P lives in bias slab rows 0:S
    h = x_ref[0].astype(jnp.float32) + b_ref[0:S, :H]                      # (S, H)

    def bdot(a_f32, w_bf16):
        # bf16 x bf16 -> f32 MXU matmul
        return jnp.dot(a_f32.astype(jnp.bfloat16), w_bf16,
                       preferred_element_type=jnp.float32)

    for l in range(num_layers):
        wb = l * w_layer_rows
        bb = b_layer_base + l * b_layer_rows

        Wq = w_ref[wb + 0 * H: wb + 1 * H, :H]
        Wk = w_ref[wb + 1 * H: wb + 2 * H, :H]
        Wv = w_ref[wb + 2 * H: wb + 3 * H, :H]
        Wo = w_ref[wb + 3 * H: wb + 4 * H, :H]
        W1 = w_ref[wb + 4 * H: wb + 5 * H, :F]
        W2 = w_ref[wb + 5 * H: wb + 5 * H + F, :H]

        bq = b_ref[bb + 0: bb + 1, :H]
        bk = b_ref[bb + 1: bb + 2, :H]
        bv = b_ref[bb + 2: bb + 3, :H]
        bo = b_ref[bb + 3: bb + 4, :H]
        g1 = b_ref[bb + 4: bb + 5, :H]
        be1 = b_ref[bb + 5: bb + 6, :H]
        b1 = b_ref[bb + 6: bb + 7, :F]
        b2 = b_ref[bb + 7: bb + 8, :H]
        g2 = b_ref[bb + 8: bb + 9, :H]
        be2 = b_ref[bb + 9: bb + 10, :H]

        # ---- multi-head self-attention ------------------------------------
        q = bdot(h, Wq) + bq                                               # (S, H)
        k = bdot(h, Wk) + bk
        v = bdot(h, Wv) + bv

        # per-head masked queries (linear in S; no (S,S,H) outer product)
        qh = (q[:, None, :] * maskT_scaled[None, :, :]).reshape(S * num_heads, H)

        # scores[(i,hh), j] = sum_d qh[(i,hh), d] * k[j, d]   (MXU, depth H)
        s = jax.lax.dot_general(
            qh.astype(jnp.bfloat16), k.astype(jnp.bfloat16),
            dimension_numbers=(((1,), (1,)), ((), ())),
            preferred_element_type=jnp.float32)                            # (S*nh, S)

        # softmax over keys (exact division for PyTorch parity)
        s = s - jnp.max(s, axis=-1, keepdims=True)
        p = jnp.exp(s)
        p = p / jnp.sum(p, axis=-1, keepdims=True)

        # per-head attention values: oh[(i,hh), d] = sum_j p[(i,hh), j] * v[j, d]
        oh = jnp.dot(p.astype(jnp.bfloat16), v.astype(jnp.bfloat16),
                     preferred_element_type=jnp.float32)                   # (S*nh, H)
        # keep only each head's own feature lanes, sum heads back onto features
        attn = jnp.sum(oh.reshape(S, num_heads, H) * maskT[None, :, :], axis=1)

        attn = bdot(attn, Wo) + bo

        # ---- residual + LayerNorm1 (post-norm, norm_first=False) ----------
        y = _layernorm(h + attn, g1, be1)

        # ---- FFN: linear1 -> ReLU -> linear2 -------------------------------
        f = jnp.maximum(bdot(y, W1) + b1, 0.0)
        f = bdot(f, W2) + b2

        # ---- residual + LayerNorm2 -----------------------------------------
        h = _layernorm(y + f, g2, be2)

    o_ref[0] = h.astype(o_ref.dtype)


# ---------------------------------------------------------------------------
# Host-side packing / wrapper
# ---------------------------------------------------------------------------
def positional_encoding(seq_len, input_dim):
    assert input_dim % 2 == 0
    pos = jnp.arange(seq_len, dtype=jnp.float32).reshape(-1, 1)
    div = jnp.power(10000.0,
                    jnp.arange(0, input_dim, 2, dtype=jnp.float32) / input_dim)
    X = pos / div
    P = jnp.zeros((seq_len, input_dim), jnp.float32)
    P = P.at[:, 0::2].set(jnp.sin(X))
    P = P.at[:, 1::2].set(jnp.cos(X))
    return P


def _pad_lanes(a, width):
    return jnp.pad(a, ((0, 0), (0, width - a.shape[-1])))


def pack_operands(layer_params, P, H, F):
    width = ((max(128, F, H) + 127) // 128) * 128

    # weight slab (bf16): per layer [Wq; Wk; Wv; Wo; W1; W2]
    w_rows = []
    for lp in layer_params:
        for name in ("wq", "wk", "wv", "wo", "w1", "w2"):
            w_rows.append(_pad_lanes(lp[name], width))
    w_slab = jnp.concatenate(w_rows, axis=0).astype(jnp.bfloat16)

    # bias / scale slab (f32): P rows first, then per-layer vectors
    S = P.shape[0]
    b_layer_base = ((S + 7) // 8) * 8
    b_rows = [_pad_lanes(P, width)]
    if b_layer_base > S:
        b_rows.append(jnp.zeros((b_layer_base - S, width), jnp.float32))
    for lp in layer_params:
        rows = [_pad_lanes(lp[name].reshape(1, -1), width) for name in _BIAS_ORDER]
        rows.append(jnp.zeros((_B_LAYER_ROWS - len(rows), width), jnp.float32))
        b_rows.extend(rows)
    b_slab = jnp.concatenate(b_rows, axis=0)
    return w_slab, b_slab, b_layer_base


def timewise_transformer(x, layer_params, num_heads):
    """x: (B, S, hidden_dim) -> (B, S, hidden_dim)."""
    B, S, H = x.shape
    assert H % num_heads == 0
    F = layer_params[0]["w1"].shape[1]
    num_layers = len(layer_params)

    P = positional_encoding(S, H)
    w_slab, b_slab, b_layer_base = pack_operands(layer_params, P, H, F)
    w_layer_rows = 5 * H + F

    kernel = functools.partial(
        transformer_kernel,
        num_heads=num_heads, num_layers=num_layers, S=S, H=H, F=F,
        w_layer_rows=w_layer_rows, b_layer_rows=_B_LAYER_ROWS,
        b_layer_base=b_layer_base)

    return pl.pallas_call(
        kernel,
        out_shape=jax.ShapeDtypeStruct((B, S, H), x.dtype),
        grid=(B,),
        in_specs=[
            pl.BlockSpec((1, S, H), lambda b: (b, 0, 0)),
            pl.BlockSpec(w_slab.shape, lambda b: (0, 0)),   # VMEM-resident weights
            pl.BlockSpec(b_slab.shape, lambda b: (0, 0)),   # VMEM-resident biases + P
        ],
        out_specs=pl.BlockSpec((1, S, H), lambda b: (b, 0, 0)),
        compiler_params=pltpu.CompilerParams(
            dimension_semantics=("parallel",)),              # second TC on v7x
    )(x, w_slab, b_slab)


def init_layer_params(key, hidden_dim, ffn_dim):
    H, F = hidden_dim, ffn_dim
    ks = jax.random.split(key, 16)
    sd = 0.02
    n = lambda k, shape: jax.random.normal(k, shape, jnp.float32) * sd
    return {
        "wq": n(ks[0], (H, H)), "wk": n(ks[1], (H, H)), "wv": n(ks[2], (H, H)),
        "wo": n(ks[3], (H, H)),
        "w1": n(ks[4], (H, F)), "w2": n(ks[5], (F, H)),
        "bq": n(ks[6], (H,)), "bk": n(ks[7], (H,)), "bv": n(ks[8], (H,)),
        "bo": n(ks[9], (H,)), "b1": n(ks[10], (F,)), "b2": n(ks[11], (H,)),
        "ln1_g": 1.0 + n(ks[12], (H,)), "ln1_b": n(ks[13], (H,)),
        "ln2_g": 1.0 + n(ks[14], (H,)), "ln2_b": n(ks[15], (H,)),
    }


# ---------------------------------------------------------------------------
# Pure-JAX reference (PyTorch semantics) for numerical sanity check
# ---------------------------------------------------------------------------
def _reference(x, layer_params, num_heads):
    B, S, H = x.shape
    hd = H // num_heads
    h = x + positional_encoding(S, H)[None]
    for p in layer_params:
        q = (h @ p["wq"] + p["bq"]).reshape(B, S, num_heads, hd).transpose(0, 2, 1, 3)
        k = (h @ p["wk"] + p["bk"]).reshape(B, S, num_heads, hd).transpose(0, 2, 1, 3)
        v = (h @ p["wv"] + p["bv"]).reshape(B, S, num_heads, hd).transpose(0, 2, 1, 3)
        s = jnp.einsum("bhqd,bhkd->bhqk", q, k) / jnp.sqrt(jnp.float32(hd))
        a = jax.nn.softmax(s, axis=-1)
        o = jnp.einsum("bhqk,bhkd->bhqd", a, v).transpose(0, 2, 1, 3).reshape(B, S, H)
        o = o @ p["wo"] + p["bo"]
        y = _layernorm(h + o, p["ln1_g"], p["ln1_b"])
        f = jax.nn.relu(y @ p["w1"] + p["b1"]) @ p["w2"] + p["b2"]
        h = _layernorm(y + f, p["ln2_g"], p["ln2_b"])
    return h


# ---------------------------------------------------------------------------
# Main
# ---------------------------------------------------------------------------
if __name__ == "__main__":
    B, S = 2, 8
    hidden_dim = 32
    num_heads = 8
    ffn_dim = 4 * hidden_dim        # default ffn_dim = 4 * hidden_dim
    encoder_layers = 2

    key = jax.random.PRNGKey(0)
    kx, *kl = jax.random.split(key, 1 + encoder_layers)
    x = jax.random.normal(kx, (B, S, hidden_dim), jnp.float32)
    layer_params = [init_layer_params(k, hidden_dim, ffn_dim) for k in kl]

    out = jax.block_until_ready(timewise_transformer(x, layer_params, num_heads))
    assert out.shape == (B, S, hidden_dim)

    ref = _reference(x, layer_params, num_heads)
    max_err = float(jnp.max(jnp.abs(out - ref)))
    assert max_err < 5e-2, f"mismatch vs reference, max abs err = {max_err}"

    print("KERNEL_OK")
</pallas_src>

<mosaic_0001>
module attributes {stable_mosaic.version = 11 : i64} {
  func.func @transformer_kernel(%arg0: i32, %arg1: memref<1x8x32xf32, #tpu.memory_space<vmem>>, %arg2: memref<576x128xbf16, #tpu.memory_space<vmem>>, %arg3: memref<40x128xf32, #tpu.memory_space<vmem>>, %arg4: memref<1x8x32xf32, #tpu.memory_space<vmem>>) attributes {dimension_semantics = [#tpu.dimension_semantics<parallel>], iteration_bounds = array<i64: 2>, scalar_prefetch = 0 : i64, scratch_operands = 0 : i64, tpu.core_type = #tpu.core_type<tc>, window_params = [{transform_indices = @transform_0, window_bounds = array<i64: 1, 8, 32>}, {pipeline_mode = #tpu.pipeline_mode<synchronous>, transform_indices = @transform_1, window_bounds = array<i64: 576, 128>}, {pipeline_mode = #tpu.pipeline_mode<synchronous>, transform_indices = @transform_2, window_bounds = array<i64: 40, 128>}, {transform_indices = @transform_3, window_bounds = array<i64: 1, 8, 32>}]} {
    %0 = tpu.iota {dimensions = array<i32: 1>} : vector<8x32xi32>
    %1 = tpu.iota {dimensions = array<i32: 0>} : vector<8x32xi32>
    %c4_i32 = arith.constant 4 : i32
    %2 = vector.broadcast %c4_i32 : i32 to vector<8x32xi32>
    %3 = arith.muli %1, %2 : vector<8x32xi32>
    %4 = arith.cmpi sge, %0, %3 : vector<8x32xi32>
    %c1_i32 = arith.constant 1 : i32
    %5 = vector.broadcast %c1_i32 : i32 to vector<8x32xi32>
    %6 = arith.addi %1, %5 : vector<8x32xi32>
    %c4_i32_0 = arith.constant 4 : i32
    %7 = vector.broadcast %c4_i32_0 : i32 to vector<8x32xi32>
    %8 = arith.muli %6, %7 : vector<8x32xi32>
    %9 = arith.cmpi slt, %0, %8 : vector<8x32xi32>
    %10 = arith.andi %4, %9 : vector<8x32xi1>
    %11 = arith.extui %10 : vector<8x32xi1> to vector<8x32xi32>
    %12 = arith.sitofp %11 : vector<8x32xi32> to vector<8x32xf32>
    %cst = arith.constant 5.000000e-01 : f32
    %13 = vector.broadcast %cst : f32 to vector<8x32xf32>
    %14 = arith.mulf %12, %13 : vector<8x32xf32>
    %c0 = arith.constant 0 : index
    %c0_1 = arith.constant 0 : index
    %c0_2 = arith.constant 0 : index
    %15 = vector.load %arg1[%c0, %c0_1, %c0_2] : memref<1x8x32xf32, #tpu.memory_space<vmem>>, vector<1x8x32xf32>
    %16 = vector.shape_cast %15 : vector<1x8x32xf32> to vector<8x32xf32>
    %c0_3 = arith.constant 0 : index
    %c0_4 = arith.constant 0 : index
    %17 = vector.load %arg3[%c0_3, %c0_4] : memref<40x128xf32, #tpu.memory_space<vmem>>, vector<8x32xf32>
    %18 = arith.addf %16, %17 : vector<8x32xf32>
    %c0_5 = arith.constant 0 : index
    %c0_6 = arith.constant 0 : index
    %19 = vector.load %arg2[%c0_5, %c0_6] : memref<576x128xbf16, #tpu.memory_space<vmem>>, vector<32x32xbf16>
    %c32 = arith.constant 32 : index
    %c0_7 = arith.constant 0 : index
    %20 = vector.load %arg2[%c32, %c0_7] : memref<576x128xbf16, #tpu.memory_space<vmem>>, vector<32x32xbf16>
    %c64 = arith.constant 64 : index
    %c0_8 = arith.constant 0 : index
    %21 = vector.load %arg2[%c64, %c0_8] : memref<576x128xbf16, #tpu.memory_space<vmem>>, vector<32x32xbf16>
    %c96 = arith.constant 96 : index
    %c0_9 = arith.constant 0 : index
    %22 = vector.load %arg2[%c96, %c0_9] : memref<576x128xbf16, #tpu.memory_space<vmem>>, vector<32x32xbf16>
    %c128 = arith.constant 128 : index
    %c0_10 = arith.constant 0 : index
    %23 = vector.load %arg2[%c128, %c0_10] : memref<576x128xbf16, #tpu.memory_space<vmem>>, vector<32x128xbf16>
    %c160 = arith.constant 160 : index
    %c0_11 = arith.constant 0 : index
    %24 = vector.load %arg2[%c160, %c0_11] : memref<576x128xbf16, #tpu.memory_space<vmem>>, vector<128x32xbf16>
    %c8 = arith.constant 8 : index
    %c0_12 = arith.constant 0 : index
    %25 = vector.load %arg3[%c8, %c0_12] : memref<40x128xf32, #tpu.memory_space<vmem>>, vector<1x32xf32>
    %c9 = arith.constant 9 : index
    %c0_13 = arith.constant 0 : index
    %26 = vector.load %arg3[%c9, %c0_13] : memref<40x128xf32, #tpu.memory_space<vmem>>, vector<1x32xf32>
    %c10 = arith.constant 10 : index
    %c0_14 = arith.constant 0 : index
    %27 = vector.load %arg3[%c10, %c0_14] : memref<40x128xf32, #tpu.memory_space<vmem>>, vector<1x32xf32>
    %c11 = arith.constant 11 : index
    %c0_15 = arith.constant 0 : index
    %28 = vector.load %arg3[%c11, %c0_15] : memref<40x128xf32, #tpu.memory_space<vmem>>, vector<1x32xf32>
    %c12 = arith.constant 12 : index
    %c0_16 = arith.constant 0 : index
    %29 = vector.load %arg3[%c12, %c0_16] : memref<40x128xf32, #tpu.memory_space<vmem>>, vector<1x32xf32>
    %c13 = arith.constant 13 : index
    %c0_17 = arith.constant 0 : index
    %30 = vector.load %arg3[%c13, %c0_17] : memref<40x128xf32, #tpu.memory_space<vmem>>, vector<1x32xf32>
    %c14 = arith.constant 14 : index
    %c0_18 = arith.constant 0 : index
    %31 = vector.load %arg3[%c14, %c0_18] : memref<40x128xf32, #tpu.memory_space<vmem>>, vector<1x128xf32>
    %c15 = arith.constant 15 : index
    %c0_19 = arith.constant 0 : index
    %32 = vector.load %arg3[%c15, %c0_19] : memref<40x128xf32, #tpu.memory_space<vmem>>, vector<1x32xf32>
    %c16 = arith.constant 16 : index
    %c0_20 = arith.constant 0 : index
    %33 = vector.load %arg3[%c16, %c0_20] : memref<40x128xf32, #tpu.memory_space<vmem>>, vector<1x32xf32>
    %c17 = arith.constant 17 : index
    %c0_21 = arith.constant 0 : index
    %34 = vector.load %arg3[%c17, %c0_21] : memref<40x128xf32, #tpu.memory_space<vmem>>, vector<1x32xf32>
    %35 = arith.truncf %18 : vector<8x32xf32> to vector<8x32xbf16>
    %cst_22 = arith.constant dense<0.000000e+00> : vector<8x32xf32>
    %36 = tpu.matmul %35, %19, %cst_22 {dimension_numbers = #tpu.dot_dimension_numbers<[1], [0], [0], [1], [0, 0, 1, 1], [], []>} : vector<8x32xbf16>, vector<32x32xbf16>, vector<8x32xf32> -> vector<8x32xf32>
    %37 = vector.broadcast %25 : vector<1x32xf32> to vector<8x32xf32>
    %38 = arith.addf %36, %37 : vector<8x32xf32>
    %39 = arith.truncf %18 : vector<8x32xf32> to vector<8x32xbf16>
    %cst_23 = arith.constant dense<0.000000e+00> : vector<8x32xf32>
    %40 = tpu.matmul %39, %20, %cst_23 {dimension_numbers = #tpu.dot_dimension_numbers<[1], [0], [0], [1], [0, 0, 1, 1], [], []>} : vector<8x32xbf16>, vector<32x32xbf16>, vector<8x32xf32> -> vector<8x32xf32>
    %41 = vector.broadcast %26 : vector<1x32xf32> to vector<8x32xf32>
    %42 = arith.addf %40, %41 : vector<8x32xf32>
    %43 = arith.truncf %18 : vector<8x32xf32> to vector<8x32xbf16>
    %cst_24 = arith.constant dense<0.000000e+00> : vector<8x32xf32>
    %44 = tpu.matmul %43, %21, %cst_24 {dimension_numbers = #tpu.dot_dimension_numbers<[1], [0], [0], [1], [0, 0, 1, 1], [], []>} : vector<8x32xbf16>, vector<32x32xbf16>, vector<8x32xf32> -> vector<8x32xf32>
    %45 = vector.broadcast %27 : vector<1x32xf32> to vector<8x32xf32>
    %46 = arith.addf %44, %45 : vector<8x32xf32>
    %47 = vector.shape_cast %38 : vector<8x32xf32> to vector<8x1x32xf32>
    %48 = vector.shape_cast %14 : vector<8x32xf32> to vector<1x8x32xf32>
    %49 = vector.broadcast %47 : vector<8x1x32xf32> to vector<8x8x32xf32>
    %50 = vector.broadcast %48 : vector<1x8x32xf32> to vector<8x8x32xf32>
    %51 = arith.mulf %49, %50 : vector<8x8x32xf32>
    %52 = vector.shape_cast %51 : vector<8x8x32xf32> to vector<64x32xf32>
    %53 = arith.truncf %52 : vector<64x32xf32> to vector<64x32xbf16>
    %54 = arith.truncf %42 : vector<8x32xf32> to vector<8x32xbf16>
    %cst_25 = arith.constant dense<0.000000e+00> : vector<64x8xf32>
    %55 = tpu.matmul %53, %54, %cst_25 {dimension_numbers = #tpu.dot_dimension_numbers<[1], [1], [0], [0], [0, 0, 1, 0], [], []>} : vector<64x32xbf16>, vector<8x32xbf16>, vector<64x8xf32> -> vector<64x8xf32>
    %cst_26 = arith.constant dense<0xFF800000> : vector<64xf32>
    %56 = vector.multi_reduction <maximumf>, %55, %cst_26 [1] : vector<64x8xf32> to vector<64xf32>
    %57 = vector.shape_cast %56 : vector<64xf32> to vector<64x1xf32>
    %58 = vector.broadcast %57 : vector<64x1xf32> to vector<64x8xf32>
    %59 = arith.subf %55, %58 : vector<64x8xf32>
    %60 = math.exp %59 : vector<64x8xf32>
    %cst_27 = arith.constant dense<0.000000e+00> : vector<64xf32>
    %61 = vector.multi_reduction <add>, %60, %cst_27 [1] : vector<64x8xf32> to vector<64xf32>
    %62 = vector.shape_cast %61 : vector<64xf32> to vector<64x1xf32>
    %63 = vector.broadcast %62 : vector<64x1xf32> to vector<64x8xf32>
    %64 = arith.divf %60, %63 : vector<64x8xf32>
    %65 = arith.truncf %64 : vector<64x8xf32> to vector<64x8xbf16>
    %66 = arith.truncf %46 : vector<8x32xf32> to vector<8x32xbf16>
    %cst_28 = arith.constant dense<0.000000e+00> : vector<64x32xf32>
    %67 = tpu.matmul %65, %66, %cst_28 {dimension_numbers = #tpu.dot_dimension_numbers<[1], [0], [0], [1], [0, 0, 1, 1], [], []>} : vector<64x8xbf16>, vector<8x32xbf16>, vector<64x32xf32> -> vector<64x32xf32>
    %68 = vector.shape_cast %67 : vector<64x32xf32> to vector<8x8x32xf32>
    %69 = vector.shape_cast %12 : vector<8x32xf32> to vector<1x8x32xf32>
    %70 = vector.broadcast %69 : vector<1x8x32xf32> to vector<8x8x32xf32>
    %71 = arith.mulf %68, %70 : vector<8x8x32xf32>
    %cst_29 = arith.constant dense<0.000000e+00> : vector<8x32xf32>
    %72 = vector.multi_reduction <add>, %71, %cst_29 [1] : vector<8x8x32xf32> to vector<8x32xf32>
    %73 = arith.truncf %72 : vector<8x32xf32> to vector<8x32xbf16>
    %cst_30 = arith.constant dense<0.000000e+00> : vector<8x32xf32>
    %74 = tpu.matmul %73, %22, %cst_30 {dimension_numbers = #tpu.dot_dimension_numbers<[1], [0], [0], [1], [0, 0, 1, 1], [], []>} : vector<8x32xbf16>, vector<32x32xbf16>, vector<8x32xf32> -> vector<8x32xf32>
    %75 = vector.broadcast %28 : vector<1x32xf32> to vector<8x32xf32>
    %76 = arith.addf %74, %75 : vector<8x32xf32>
    %77 = arith.addf %18, %76 : vector<8x32xf32>
    %cst_31 = arith.constant dense<0.000000e+00> : vector<8xf32>
    %78 = vector.multi_reduction <add>, %77, %cst_31 [1] : vector<8x32xf32> to vector<8xf32>
    %79 = vector.shape_cast %78 : vector<8xf32> to vector<8x1xf32>
    %cst_32 = arith.constant 3.200000e+01 : f32
    %80 = vector.broadcast %cst_32 : f32 to vector<8x1xf32>
    %81 = arith.divf %79, %80 : vector<8x1xf32>
    %82 = vector.broadcast %81 : vector<8x1xf32> to vector<8x32xf32>
    %83 = arith.subf %77, %82 : vector<8x32xf32>
    %84 = arith.mulf %83, %83 : vector<8x32xf32>
    %cst_33 = arith.constant dense<0.000000e+00> : vector<8xf32>
    %85 = vector.multi_reduction <add>, %84, %cst_33 [1] : vector<8x32xf32> to vector<8xf32>
    %86 = vector.shape_cast %85 : vector<8xf32> to vector<8x1xf32>
    %cst_34 = arith.constant 3.200000e+01 : f32
    %87 = vector.broadcast %cst_34 : f32 to vector<8x1xf32>
    %88 = arith.divf %86, %87 : vector<8x1xf32>
    %89 = vector.broadcast %81 : vector<8x1xf32> to vector<8x32xf32>
    %90 = arith.subf %77, %89 : vector<8x32xf32>
    %cst_35 = arith.constant 9.99999974E-6 : f32
    %91 = vector.broadcast %cst_35 : f32 to vector<8x1xf32>
    %92 = arith.addf %88, %91 : vector<8x1xf32>
    %93 = math.rsqrt %92 : vector<8x1xf32>
    %94 = vector.broadcast %93 : vector<8x1xf32> to vector<8x32xf32>
    %95 = arith.mulf %90, %94 : vector<8x32xf32>
    %96 = vector.broadcast %29 : vector<1x32xf32> to vector<8x32xf32>
    %97 = arith.mulf %95, %96 : vector<8x32xf32>
    %98 = vector.broadcast %30 : vector<1x32xf32> to vector<8x32xf32>
    %99 = arith.addf %97, %98 : vector<8x32xf32>
    %100 = arith.truncf %99 : vector<8x32xf32> to vector<8x32xbf16>
    %cst_36 = arith.constant dense<0.000000e+00> : vector<8x128xf32>
    %101 = tpu.matmul %100, %23, %cst_36 {dimension_numbers = #tpu.dot_dimension_numbers<[1], [0], [0], [1], [0, 0, 1, 1], [], []>} : vector<8x32xbf16>, vector<32x128xbf16>, vector<8x128xf32> -> vector<8x128xf32>
    %102 = vector.broadcast %31 : vector<1x128xf32> to vector<8x128xf32>
    %103 = arith.addf %101, %102 : vector<8x128xf32>
    %cst_37 = arith.constant 0.000000e+00 : f32
    %104 = vector.broadcast %cst_37 : f32 to vector<8x128xf32>
    %105 = arith.maximumf %103, %104 : vector<8x128xf32>
    %106 = arith.truncf %105 : vector<8x128xf32> to vector<8x128xbf16>
    %cst_38 = arith.constant dense<0.000000e+00> : vector<8x32xf32>
    %107 = tpu.matmul %106, %24, %cst_38 {dimension_numbers = #tpu.dot_dimension_numbers<[1], [0], [0], [1], [0, 0, 1, 1], [], []>} : vector<8x128xbf16>, vector<128x32xbf16>, vector<8x32xf32> -> vector<8x32xf32>
    %108 = vector.broadcast %32 : vector<1x32xf32> to vector<8x32xf32>
    %109 = arith.addf %107, %108 : vector<8x32xf32>
    %110 = arith.addf %99, %109 : vector<8x32xf32>
    %cst_39 = arith.constant dense<0.000000e+00> : vector<8xf32>
    %111 = vector.multi_reduction <add>, %110, %cst_39 [1] : vector<8x32xf32> to vector<8xf32>
    %112 = vector.shape_cast %111 : vector<8xf32> to vector<8x1xf32>
    %cst_40 = arith.constant 3.200000e+01 : f32
    %113 = vector.broadcast %cst_40 : f32 to vector<8x1xf32>
    %114 = arith.divf %112, %113 : vector<8x1xf32>
    %115 = vector.broadcast %114 : vector<8x1xf32> to vector<8x32xf32>
    %116 = arith.subf %110, %115 : vector<8x32xf32>
    %117 = arith.mulf %116, %116 : vector<8x32xf32>
    %cst_41 = arith.constant dense<0.000000e+00> : vector<8xf32>
    %118 = vector.multi_reduction <add>, %117, %cst_41 [1] : vector<8x32xf32> to vector<8xf32>
    %119 = vector.shape_cast %118 : vector<8xf32> to vector<8x1xf32>
    %cst_42 = arith.constant 3.200000e+01 : f32
    %120 = vector.broadcast %cst_42 : f32 to vector<8x1xf32>
    %121 = arith.divf %119, %120 : vector<8x1xf32>
    %122 = vector.broadcast %114 : vector<8x1xf32> to vector<8x32xf32>
    %123 = arith.subf %110, %122 : vector<8x32xf32>
    %cst_43 = arith.constant 9.99999974E-6 : f32
    %124 = vector.broadcast %cst_43 : f32 to vector<8x1xf32>
    %125 = arith.addf %121, %124 : vector<8x1xf32>
    %126 = math.rsqrt %125 : vector<8x1xf32>
    %127 = vector.broadcast %126 : vector<8x1xf32> to vector<8x32xf32>
    %128 = arith.mulf %123, %127 : vector<8x32xf32>
    %129 = vector.broadcast %33 : vector<1x32xf32> to vector<8x32xf32>
    %130 = arith.mulf %128, %129 : vector<8x32xf32>
    %131 = vector.broadcast %34 : vector<1x32xf32> to vector<8x32xf32>
    %132 = arith.addf %130, %131 : vector<8x32xf32>
    %c288 = arith.constant 288 : index
    %c0_44 = arith.constant 0 : index
    %133 = vector.load %arg2[%c288, %c0_44] : memref<576x128xbf16, #tpu.memory_space<vmem>>, vector<32x32xbf16>
    %c320 = arith.constant 320 : index
    %c0_45 = arith.constant 0 : index
    %134 = vector.load %arg2[%c320, %c0_45] : memref<576x128xbf16, #tpu.memory_space<vmem>>, vector<32x32xbf16>
    %c352 = arith.constant 352 : index
    %c0_46 = arith.constant 0 : index
    %135 = vector.load %arg2[%c352, %c0_46] : memref<576x128xbf16, #tpu.memory_space<vmem>>, vector<32x32xbf16>
    %c384 = arith.constant 384 : index
    %c0_47 = arith.constant 0 : index
    %136 = vector.load %arg2[%c384, %c0_47] : memref<576x128xbf16, #tpu.memory_space<vmem>>, vector<32x32xbf16>
    %c416 = arith.constant 416 : index
    %c0_48 = arith.constant 0 : index
    %137 = vector.load %arg2[%c416, %c0_48] : memref<576x128xbf16, #tpu.memory_space<vmem>>, vector<32x128xbf16>
    %c448 = arith.constant 448 : index
    %c0_49 = arith.constant 0 : index
    %138 = vector.load %arg2[%c448, %c0_49] : memref<576x128xbf16, #tpu.memory_space<vmem>>, vector<128x32xbf16>
    %c24 = arith.constant 24 : index
    %c0_50 = arith.constant 0 : index
    %139 = vector.load %arg3[%c24, %c0_50] : memref<40x128xf32, #tpu.memory_space<vmem>>, vector<1x32xf32>
    %c25 = arith.constant 25 : index
    %c0_51 = arith.constant 0 : index
    %140 = vector.load %arg3[%c25, %c0_51] : memref<40x128xf32, #tpu.memory_space<vmem>>, vector<1x32xf32>
    %c26 = arith.constant 26 : index
    %c0_52 = arith.constant 0 : index
    %141 = vector.load %arg3[%c26, %c0_52] : memref<40x128xf32, #tpu.memory_space<vmem>>, vector<1x32xf32>
    %c27 = arith.constant 27 : index
    %c0_53 = arith.constant 0 : index
    %142 = vector.load %arg3[%c27, %c0_53] : memref<40x128xf32, #tpu.memory_space<vmem>>, vector<1x32xf32>
    %c28 = arith.constant 28 : index
    %c0_54 = arith.constant 0 : index
    %143 = vector.load %arg3[%c28, %c0_54] : memref<40x128xf32, #tpu.memory_space<vmem>>, vector<1x32xf32>
    %c29 = arith.constant 29 : index
    %c0_55 = arith.constant 0 : index
    %144 = vector.load %arg3[%c29, %c0_55] : memref<40x128xf32, #tpu.memory_space<vmem>>, vector<1x32xf32>
    %c30 = arith.constant 30 : index
    %c0_56 = arith.constant 0 : index
    %145 = vector.load %arg3[%c30, %c0_56] : memref<40x128xf32, #tpu.memory_space<vmem>>, vector<1x128xf32>
    %c31 = arith.constant 31 : index
    %c0_57 = arith.constant 0 : index
    %146 = vector.load %arg3[%c31, %c0_57] : memref<40x128xf32, #tpu.memory_space<vmem>>, vector<1x32xf32>
    %c32_58 = arith.constant 32 : index
    %c0_59 = arith.constant 0 : index
    %147 = vector.load %arg3[%c32_58, %c0_59] : memref<40x128xf32, #tpu.memory_space<vmem>>, vector<1x32xf32>
    %c33 = arith.constant 33 : index
    %c0_60 = arith.constant 0 : index
    %148 = vector.load %arg3[%c33, %c0_60] : memref<40x128xf32, #tpu.memory_space<vmem>>, vector<1x32xf32>
    %149 = arith.truncf %132 : vector<8x32xf32> to vector<8x32xbf16>
    %cst_61 = arith.constant dense<0.000000e+00> : vector<8x32xf32>
    %150 = tpu.matmul %149, %133, %cst_61 {dimension_numbers = #tpu.dot_dimension_numbers<[1], [0], [0], [1], [0, 0, 1, 1], [], []>} : vector<8x32xbf16>, vector<32x32xbf16>, vector<8x32xf32> -> vector<8x32xf32>
    %151 = vector.broadcast %139 : vector<1x32xf32> to vector<8x32xf32>
    %152 = arith.addf %150, %151 : vector<8x32xf32>
    %153 = arith.truncf %132 : vector<8x32xf32> to vector<8x32xbf16>
    %cst_62 = arith.constant dense<0.000000e+00> : vector<8x32xf32>
    %154 = tpu.matmul %153, %134, %cst_62 {dimension_numbers = #tpu.dot_dimension_numbers<[1], [0], [0], [1], [0, 0, 1, 1], [], []>} : vector<8x32xbf16>, vector<32x32xbf16>, vector<8x32xf32> -> vector<8x32xf32>
    %155 = vector.broadcast %140 : vector<1x32xf32> to vector<8x32xf32>
    %156 = arith.addf %154, %155 : vector<8x32xf32>
    %157 = arith.truncf %132 : vector<8x32xf32> to vector<8x32xbf16>
    %cst_63 = arith.constant dense<0.000000e+00> : vector<8x32xf32>
    %158 = tpu.matmul %157, %135, %cst_63 {dimension_numbers = #tpu.dot_dimension_numbers<[1], [0], [0], [1], [0, 0, 1, 1], [], []>} : vector<8x32xbf16>, vector<32x32xbf16>, vector<8x32xf32> -> vector<8x32xf32>
    %159 = vector.broadcast %141 : vector<1x32xf32> to vector<8x32xf32>
    %160 = arith.addf %158, %159 : vector<8x32xf32>
    %161 = vector.shape_cast %152 : vector<8x32xf32> to vector<8x1x32xf32>
    %162 = vector.shape_cast %14 : vector<8x32xf32> to vector<1x8x32xf32>
    %163 = vector.broadcast %161 : vector<8x1x32xf32> to vector<8x8x32xf32>
    %164 = vector.broadcast %162 : vector<1x8x32xf32> to vector<8x8x32xf32>
    %165 = arith.mulf %163, %164 : vector<8x8x32xf32>
    %166 = vector.shape_cast %165 : vector<8x8x32xf32> to vector<64x32xf32>
    %167 = arith.truncf %166 : vector<64x32xf32> to vector<64x32xbf16>
    %168 = arith.truncf %156 : vector<8x32xf32> to vector<8x32xbf16>
    %cst_64 = arith.constant dense<0.000000e+00> : vector<64x8xf32>
    %169 = tpu.matmul %167, %168, %cst_64 {dimension_numbers = #tpu.dot_dimension_numbers<[1], [1], [0], [0], [0, 0, 1, 0], [], []>} : vector<64x32xbf16>, vector<8x32xbf16>, vector<64x8xf32> -> vector<64x8xf32>
    %cst_65 = arith.constant dense<0xFF800000> : vector<64xf32>
    %170 = vector.multi_reduction <maximumf>, %169, %cst_65 [1] : vector<64x8xf32> to vector<64xf32>
    %171 = vector.shape_cast %170 : vector<64xf32> to vector<64x1xf32>
    %172 = vector.broadcast %171 : vector<64x1xf32> to vector<64x8xf32>
    %173 = arith.subf %169, %172 : vector<64x8xf32>
    %174 = math.exp %173 : vector<64x8xf32>
    %cst_66 = arith.constant dense<0.000000e+00> : vector<64xf32>
    %175 = vector.multi_reduction <add>, %174, %cst_66 [1] : vector<64x8xf32> to vector<64xf32>
    %176 = vector.shape_cast %175 : vector<64xf32> to vector<64x1xf32>
    %177 = vector.broadcast %176 : vector<64x1xf32> to vector<64x8xf32>
    %178 = arith.divf %174, %177 : vector<64x8xf32>
    %179 = arith.truncf %178 : vector<64x8xf32> to vector<64x8xbf16>
    %180 = arith.truncf %160 : vector<8x32xf32> to vector<8x32xbf16>
    %cst_67 = arith.constant dense<0.000000e+00> : vector<64x32xf32>
    %181 = tpu.matmul %179, %180, %cst_67 {dimension_numbers = #tpu.dot_dimension_numbers<[1], [0], [0], [1], [0, 0, 1, 1], [], []>} : vector<64x8xbf16>, vector<8x32xbf16>, vector<64x32xf32> -> vector<64x32xf32>
    %182 = vector.shape_cast %181 : vector<64x32xf32> to vector<8x8x32xf32>
    %183 = vector.shape_cast %12 : vector<8x32xf32> to vector<1x8x32xf32>
    %184 = vector.broadcast %183 : vector<1x8x32xf32> to vector<8x8x32xf32>
    %185 = arith.mulf %182, %184 : vector<8x8x32xf32>
    %cst_68 = arith.constant dense<0.000000e+00> : vector<8x32xf32>
    %186 = vector.multi_reduction <add>, %185, %cst_68 [1] : vector<8x8x32xf32> to vector<8x32xf32>
    %187 = arith.truncf %186 : vector<8x32xf32> to vector<8x32xbf16>
    %cst_69 = arith.constant dense<0.000000e+00> : vector<8x32xf32>
    %188 = tpu.matmul %187, %136, %cst_69 {dimension_numbers = #tpu.dot_dimension_numbers<[1], [0], [0], [1], [0, 0, 1, 1], [], []>} : vector<8x32xbf16>, vector<32x32xbf16>, vector<8x32xf32> -> vector<8x32xf32>
    %189 = vector.broadcast %142 : vector<1x32xf32> to vector<8x32xf32>
    %190 = arith.addf %188, %189 : vector<8x32xf32>
    %191 = arith.addf %132, %190 : vector<8x32xf32>
    %cst_70 = arith.constant dense<0.000000e+00> : vector<8xf32>
    %192 = vector.multi_reduction <add>, %191, %cst_70 [1] : vector<8x32xf32> to vector<8xf32>
    %193 = vector.shape_cast %192 : vector<8xf32> to vector<8x1xf32>
    %cst_71 = arith.constant 3.200000e+01 : f32
    %194 = vector.broadcast %cst_71 : f32 to vector<8x1xf32>
    %195 = arith.divf %193, %194 : vector<8x1xf32>
    %196 = vector.broadcast %195 : vector<8x1xf32> to vector<8x32xf32>
    %197 = arith.subf %191, %196 : vector<8x32xf32>
    %198 = arith.mulf %197, %197 : vector<8x32xf32>
    %cst_72 = arith.constant dense<0.000000e+00> : vector<8xf32>
    %199 = vector.multi_reduction <add>, %198, %cst_72 [1] : vector<8x32xf32> to vector<8xf32>
    %200 = vector.shape_cast %199 : vector<8xf32> to vector<8x1xf32>
    %cst_73 = arith.constant 3.200000e+01 : f32
    %201 = vector.broadcast %cst_73 : f32 to vector<8x1xf32>
    %202 = arith.divf %200, %201 : vector<8x1xf32>
    %203 = vector.broadcast %195 : vector<8x1xf32> to vector<8x32xf32>
    %204 = arith.subf %191, %203 : vector<8x32xf32>
    %cst_74 = arith.constant 9.99999974E-6 : f32
    %205 = vector.broadcast %cst_74 : f32 to vector<8x1xf32>
    %206 = arith.addf %202, %205 : vector<8x1xf32>
    %207 = math.rsqrt %206 : vector<8x1xf32>
    %208 = vector.broadcast %207 : vector<8x1xf32> to vector<8x32xf32>
    %209 = arith.mulf %204, %208 : vector<8x32xf32>
    %210 = vector.broadcast %143 : vector<1x32xf32> to vector<8x32xf32>
    %211 = arith.mulf %209, %210 : vector<8x32xf32>
    %212 = vector.broadcast %144 : vector<1x32xf32> to vector<8x32xf32>
    %213 = arith.addf %211, %212 : vector<8x32xf32>
    %214 = arith.truncf %213 : vector<8x32xf32> to vector<8x32xbf16>
    %cst_75 = arith.constant dense<0.000000e+00> : vector<8x128xf32>
    %215 = tpu.matmul %214, %137, %cst_75 {dimension_numbers = #tpu.dot_dimension_numbers<[1], [0], [0], [1], [0, 0, 1, 1], [], []>} : vector<8x32xbf16>, vector<32x128xbf16>, vector<8x128xf32> -> vector<8x128xf32>
    %216 = vector.broadcast %145 : vector<1x128xf32> to vector<8x128xf32>
    %217 = arith.addf %215, %216 : vector<8x128xf32>
    %cst_76 = arith.constant 0.000000e+00 : f32
    %218 = vector.broadcast %cst_76 : f32 to vector<8x128xf32>
    %219 = arith.maximumf %217, %218 : vector<8x128xf32>
    %220 = arith.truncf %219 : vector<8x128xf32> to vector<8x128xbf16>
    %cst_77 = arith.constant dense<0.000000e+00> : vector<8x32xf32>
    %221 = tpu.matmul %220, %138, %cst_77 {dimension_numbers = #tpu.dot_dimension_numbers<[1], [0], [0], [1], [0, 0, 1, 1], [], []>} : vector<8x128xbf16>, vector<128x32xbf16>, vector<8x32xf32> -> vector<8x32xf32>
    %222 = vector.broadcast %146 : vector<1x32xf32> to vector<8x32xf32>
    %223 = arith.addf %221, %222 : vector<8x32xf32>
    %224 = arith.addf %213, %223 : vector<8x32xf32>
    %cst_78 = arith.constant dense<0.000000e+00> : vector<8xf32>
    %225 = vector.multi_reduction <add>, %224, %cst_78 [1] : vector<8x32xf32> to vector<8xf32>
    %226 = vector.shape_cast %225 : vector<8xf32> to vector<8x1xf32>
    %cst_79 = arith.constant 3.200000e+01 : f32
    %227 = vector.broadcast %cst_79 : f32 to vector<8x1xf32>
    %228 = arith.divf %226, %227 : vector<8x1xf32>
    %229 = vector.broadcast %228 : vector<8x1xf32> to vector<8x32xf32>
    %230 = arith.subf %224, %229 : vector<8x32xf32>
    %231 = arith.mulf %230, %230 : vector<8x32xf32>
    %cst_80 = arith.constant dense<0.000000e+00> : vector<8xf32>
    %232 = vector.multi_reduction <add>, %231, %cst_80 [1] : vector<8x32xf32> to vector<8xf32>
    %233 = vector.shape_cast %232 : vector<8xf32> to vector<8x1xf32>
    %cst_81 = arith.constant 3.200000e+01 : f32
    %234 = vector.broadcast %cst_81 : f32 to vector<8x1xf32>
    %235 = arith.divf %233, %234 : vector<8x1xf32>
    %236 = vector.broadcast %228 : vector<8x1xf32> to vector<8x32xf32>
    %237 = arith.subf %224, %236 : vector<8x32xf32>
    %cst_82 = arith.constant 9.99999974E-6 : f32
    %238 = vector.broadcast %cst_82 : f32 to vector<8x1xf32>
    %239 = arith.addf %235, %238 : vector<8x1xf32>
    %240 = math.rsqrt %239 : vector<8x1xf32>
    %241 = vector.broadcast %240 : vector<8x1xf32> to vector<8x32xf32>
    %242 = arith.mulf %237, %241 : vector<8x32xf32>
    %243 = vector.broadcast %147 : vector<1x32xf32> to vector<8x32xf32>
    %244 = arith.mulf %242, %243 : vector<8x32xf32>
    %245 = vector.broadcast %148 : vector<1x32xf32> to vector<8x32xf32>
    %246 = arith.addf %244, %245 : vector<8x32xf32>
    %c0_83 = arith.constant 0 : index
    %c0_84 = arith.constant 0 : index
    %c0_85 = arith.constant 0 : index
    %247 = vector.load %arg4[%c0_83, %c0_84, %c0_85] : memref<1x8x32xf32, #tpu.memory_space<vmem>>, vector<1x8x32xf32>
    %248 = vector.shape_cast %247 : vector<1x8x32xf32> to vector<8x32xf32>
    %249 = vector.shape_cast %246 : vector<8x32xf32> to vector<1x8x32xf32>
    tpu.vector_store %arg4[%c0_83, %c0_84, %c0_85], %249 {strides = array<i32>} : memref<1x8x32xf32, #tpu.memory_space<vmem>>, vector<1x8x32xf32>,
    return
  }
  func.func @transform_0(%arg0: i32) -> (i32, i32, i32) {
    %c0_i32 = arith.constant 0 : i32
    %c0_i32_0 = arith.constant 0 : i32
    %c0_i32_1 = arith.constant 0 : i32
    return %arg0, %c0_i32, %c0_i32_0 : i32, i32, i32
  }
  func.func @transform_1(%arg0: i32) -> (i32, i32) {
    %c0_i32 = arith.constant 0 : i32
    %c0_i32_0 = arith.constant 0 : i32
    %c0_i32_1 = arith.constant 0 : i32
    return %c0_i32, %c0_i32_0 : i32, i32
  }
  func.func @transform_2(%arg0: i32) -> (i32, i32) {
    %c0_i32 = arith.constant 0 : i32
    %c0_i32_0 = arith.constant 0 : i32
    %c0_i32_1 = arith.constant 0 : i32
    return %c0_i32, %c0_i32_0 : i32, i32
  }
  func.func @transform_3(%arg0: i32) -> (i32, i32, i32) {
    %c0_i32 = arith.constant 0 : i32
    %c0_i32_0 = arith.constant 0 : i32
    %c0_i32_1 = arith.constant 0 : i32
    return %arg0, %c0_i32, %c0_i32_0 : i32, i32, i32
  }
}

</mosaic_0001>

<llo_original>
// kernel: tpu_custom_call.1
$region0: #{tpu_custom_call.1}
  #allocation0 [shape = 'u32[]', space=smem, size = 0x4, offset = 0x4, fixed_abs, tag = 'smem constant byte address 0x4 - core index']
  #allocation1 [shape = 'u32[144,128]{1,0:T(1,128)}', space=vmem, size = 0x12000, scoped, tag = 'internal scratch']
  %s0 = inlined_call_operand.hbm [shape: f32[2,8,32], index: 0, kind: input, shape index: {}]
  %s1 = inlined_call_operand.hbm [shape: bf16[576,128], index: 1, kind: input, shape index: {}]
  %s2 = inlined_call_operand.hbm [shape: f32[40,128], index: 2, kind: input, shape index: {}]
  %s3 = inlined_call_operand.hbm [shape: f32[2,8,32], index: 3, kind: output, shape index: {}]
  %s4 = sld [smem:[#allocation0]]
  $region57: #{tpu_custom_call.1} parent=0
    _
  %s6 = ssub.s32 1, %s4
  %s7 = scalar_select 0, %s6, %s4
  $region1: #{tpu_custom_call.1} parent=0
    #allocation2 [shape = 'u8[8192]{0}', space=vmem, size = 0x2000, scoped, tag = 'input window, operand 0']
    #allocation3 [shape = 's32[2]{0}', space=sflag, size = 0x8, scoped, tag = 'scoped memory for tpu_custom_call.1']
    #allocation4 [shape = 's32[2]{0}', space=sflag, size = 0x8, scoped, tag = 'scoped memory for tpu_custom_call.1']
    #allocation5 [shape = 'u8[147456]{0}', space=vmem, size = 0x24000, scoped, tag = 'input window, operand 1, single buffered']
    #allocation6 [shape = 's32[1]{0}', space=sflag, size = 0x4, scoped, tag = 'scoped memory for tpu_custom_call.1']
    #allocation7 [shape = 'u8[20480]{0}', space=vmem, size = 0x5000, scoped, tag = 'input window, operand 2, single buffered']
    #allocation8 [shape = 'u8[8192]{0}', space=vmem, size = 0x2000, scoped, tag = 'output window, operand 0']
    %8 = vsyncpa [#allocation3], 0
    %s9 = scalar_lea.sflag [#allocation3], 1
    %10 = vsyncpa %s9, 0
    %11 = vsyncpa [#allocation6], 0
    %12 = vsyncpa [#allocation4], 0
    %s13 = scalar_lea.sflag [#allocation4], 1
    %14 = vsyncpa %s13, 0
    loop: start=0, step=1, limit=4
    $region2: #{tpu_custom_call.1} parent=1 // loop_pre_header
      _
    $region3: #{tpu_custom_call.1} parent=1 // loop_header
      %s16 = sphi 0, %s20
      %p17 = scmp.ge.s32.totalorder %s16, 4
      %s26 = sphi 0, %s28
      %s29 = sphi 0, %s26
      %s30 = sphi 0, %s29
      %s46 = sphi 0, %s30
      %s50 = sphi 0, %s50
      %s52 = sphi 0, %s50
      %s53 = sphi 0, %s52
      %s67 = sphi 0, %s53
      %s71 = sphi 0, %s71
      %s73 = sphi 0, %s71
      %s74 = sphi 0, %s73
      %s88 = sphi 0, %s74
      %s94 = sphi 0, %s96
      %s97 = sphi 0, %s94
      %s98 = sphi 0, %s97
      %s114 = sphi 0, %s98
    $region4: #{tpu_custom_call.1} parent=1 // loop_header_branch
      %19 = sbr.rel (%p17) target = $region8
    $region5: #{tpu_custom_call.1} parent=1 // loop_body
      %s21 = ssub.s32 %s16, 1
      %s22 = ssub.s32 %s16, 2
      %s23 = sadd.s32 %s16, 1
      %s24 = ssub.s32 %s16, %s23
      %p25 = scmp.eq.s32.totalorder %s24, 0
      %s27 = sadd.s32 %s26, 1
      %s28 = scalar_select %p25, %s26, %s27
      %p31 = pneg %p25
      %p32 = scmp.eq.s32.totalorder %s16, 1
      %p33 = por %p31, %p32
      %p34 = scmp.ne.s32.totalorder %s26, %s29
      %p35 = scmp.eq.s32.totalorder %s16, 0
      %p36 = por %p34, %p35
      %p37 = scmp.ne.s32.totalorder %s26, %s29
      %p38 = scmp.eq.s32.totalorder %s21, 1
      %p39 = por %p37, %p38
      %p40 = scmp.ne.s32.totalorder %s29, %s30
      %p41 = scmp.eq.s32.totalorder %s21, 0
      %p42 = por %p40, %p41
      %p43 = scmp.ne.s32.totalorder %s29, %s30
      %p44 = scmp.eq.s32.totalorder %s22, 1
      %p45 = por %p43, %p44
      %p47 = scmp.ne.s32.totalorder %s30, %s46
      %p48 = scmp.eq.s32.totalorder %s22, 0
      %p49 = por %p47, %p48
      %s51 = sadd.s32 %s50, 1
      %p54 = scmp.eq.s32.totalorder %s16, 1
      %p55 = scmp.ne.s32.totalorder %s50, %s52
      %p56 = scmp.eq.s32.totalorder %s16, 0
      %p57 = por %p55, %p56
      %p58 = scmp.ne.s32.totalorder %s50, %s52
      %p59 = scmp.eq.s32.totalorder %s21, 1
      %p60 = por %p58, %p59
      %p61 = scmp.ne.s32.totalorder %s52, %s53
      %p62 = scmp.eq.s32.totalorder %s21, 0
      %p63 = por %p61, %p62
      %p64 = scmp.ne.s32.totalorder %s52, %s53
      %p65 = scmp.eq.s32.totalorder %s22, 1
      %p66 = por %p64, %p65
      %p68 = scmp.ne.s32.totalorder %s53, %s67
      %p69 = scmp.eq.s32.totalorder %s22, 0
      %p70 = por %p68, %p69
      %s72 = sadd.s32 %s71, 1
      %p75 = scmp.eq.s32.totalorder %s16, 1
      %p76 = scmp.ne.s32.totalorder %s71, %s73
      %p77 = scmp.eq.s32.totalorder %s16, 0
      %p78 = por %p76, %p77
      %p79 = scmp.ne.s32.totalorder %s71, %s73
      %p80 = scmp.eq.s32.totalorder %s21, 1
      %p81 = por %p79, %p80
      %p82 = scmp.ne.s32.totalorder %s73, %s74
      %p83 = scmp.eq.s32.totalorder %s21, 0
      %p84 = por %p82, %p83
      %p85 = scmp.ne.s32.totalorder %s73, %s74
      %p86 = scmp.eq.s32.totalorder %s22, 1
      %p87 = por %p85, %p86
      %p89 = scmp.ne.s32.totalorder %s74, %s88
      %p90 = scmp.eq.s32.totalorder %s22, 0
      %p91 = por %p89, %p90
      %s92 = ssub.s32 %s16, %s23
      %p93 = scmp.eq.s32.totalorder %s92, 0
      %s95 = sadd.s32 %s94, 1
      %s96 = scalar_select %p93, %s94, %s95
      %p99 = pneg %p93
      %p100 = scmp.eq.s32.totalorder %s16, 1
      %p101 = por %p99, %p100
      %p102 = scmp.ne.s32.totalorder %s94, %s97
      %p103 = scmp.eq.s32.totalorder %s16, 0
      %p104 = por %p102, %p103
      %p105 = scmp.ne.s32.totalorder %s94, %s97
      %p106 = scmp.eq.s32.totalorder %s21, 1
      %p107 = por %p105, %p106
      %p108 = scmp.ne.s32.totalorder %s97, %s98
      %p109 = scmp.eq.s32.totalorder %s21, 0
      %p110 = por %p108, %p109
      %p111 = scmp.ne.s32.totalorder %s97, %s98
      %p112 = scmp.eq.s32.totalorder %s22, 1
      %p113 = por %p111, %p112
      %p115 = scmp.ne.s32.totalorder %s98, %s114
      %p116 = scmp.eq.s32.totalorder %s22, 0
      %p117 = por %p115, %p116
      %p118 = scmp.le.s32.totalorder 1, %s16
      %p119 = scmp.lt.s32.totalorder %s16, 3
      %p120 = pnand %p118, %p119
      %p121 = pneg %p120
      // Predicated region
      $region9: #{tpu_custom_call.1} parent=5 // pred_check
        _
      $region10: #{tpu_custom_call.1} parent=5 // pred_check_branch
        %123 = sbr.rel (%p120) target = $region12
      $region11: #{tpu_custom_call.1} parent=5 // pred_region
        %s124 = ssub.s32 %s16, 1
        // Predicated region
        $region13: #{tpu_custom_call.1} parent=11 // pred_check
          %p125 = pneg %p63
        $region14: #{tpu_custom_call.1} parent=11 // pred_check_branch
          %127 = sbr.rel (%p125) target = $region16
        $region15: #{tpu_custom_call.1} parent=11 // pred_region
          %s129 = ssub.s32 4608, 4608
          %130 = vsyncadd [#allocation6], %s129
          %s131 = sshll.u32 [#allocation5], 4
          %s132 = int_to_ptr.vmem [resolvable:$true] %s131
          %137 = dma.hbm_to_vmem [thread:$0]  %s1, 4608, %s132, [#allocation6], 64, 64, 4
        $region16: #{tpu_custom_call.1} parent=11 // pred_fallthru
          _
        // Predicated region
        $region17: #{tpu_custom_call.1} parent=11 // pred_check
          %p138 = pneg %p84
        $region18: #{tpu_custom_call.1} parent=11 // pred_check_branch
          %140 = sbr.rel (%p138) target = $region20
        $region19: #{tpu_custom_call.1} parent=11 // pred_region
          %s142 = ssub.s32 640, 640
          %143 = vsyncadd [#allocation6], %s142
          %s144 = sshll.u32 [#allocation7], 4
          %s145 = int_to_ptr.vmem [resolvable:$true] %s144
          %150 = dma.hbm_to_vmem [thread:$0]  %s2, 640, %s145, [#allocation6], 128, 128, 8
        $region20: #{tpu_custom_call.1} parent=11 // pred_fallthru
          _
      $region12: #{tpu_custom_call.1} parent=5 // pred_fallthru
        _
      %p151 = scmp.lt.s32.totalorder %s16, 2
      // Predicated region
      $region21: #{tpu_custom_call.1} parent=5 // pred_check
        %p152 = pneg %p151
      $region22: #{tpu_custom_call.1} parent=5 // pred_check_branch
        %154 = sbr.rel (%p152) target = $region24
      $region23: #{tpu_custom_call.1} parent=5 // pred_region
        // Predicated region
        $region25: #{tpu_custom_call.1} parent=23 // pred_check
          %p155 = pneg %p36
        $region26: #{tpu_custom_call.1} parent=23 // pred_check_branch
          %157 = sbr.rel (%p155) target = $region28
        $region27: #{tpu_custom_call.1} parent=23 // pred_region
          %s158 = sand.u32 %s26, 1
          %s159 = scalar_lea.sflag [#allocation3], %s158
          %s160 = sand.u32 %s26, 1
          %s161 = smul.addr %s160, 8
          %s162 = scalar_lea.vmem [#allocation2], %s161
          %s164 = ssub.s32 128, 128
          %165 = vsyncadd %s159, %s164
          %s166 = smul.addr %s16, 128
          %s167 = scalar_lea.hbm %s0, %s166
          %s169 = sshll.u32 %s162, 4
          %s170 = int_to_ptr.vmem [resolvable:$true] %s169
          %172 = dma.hbm_to_vmem [thread:$0]  %s167, 128, %s170, %s159
        $region28: #{tpu_custom_call.1} parent=23 // pred_fallthru
          _
      $region24: #{tpu_custom_call.1} parent=5 // pred_fallthru
        _
      %p173 = scmp.le.s32.totalorder 1, %s16
      %p174 = scmp.lt.s32.totalorder %s16, 3
      %p175 = pnand %p173, %p174
      %p176 = pneg %p175
      // Predicated region
      $region29: #{tpu_custom_call.1} parent=5 // pred_check
        _
      $region30: #{tpu_custom_call.1} parent=5 // pred_check_branch
        %178 = sbr.rel (%p175) target = $region32
      $region31: #{tpu_custom_call.1} parent=5 // pred_region
        %s179 = ssub.s32 %s16, 1
        %s180 = sand.u32 %s29, 1
        %s181 = scalar_lea.sflag [#allocation3], %s180
        %s182 = sand.u32 %s29, 1
        %s183 = smul.addr %s182, 8
        %s184 = scalar_lea.vmem [#allocation2], %s183
        // Predicated region
        $region33: #{tpu_custom_call.1} parent=31 // pred_check
          %p185 = pneg %p42
        $region34: #{tpu_custom_call.1} parent=31 // pred_check_branch
          %187 = sbr.rel (%p185) target = $region36
        $region35: #{tpu_custom_call.1} parent=31 // pred_region
          %188 = dma.done %s181, 128
        $region36: #{tpu_custom_call.1} parent=31 // pred_fallthru
          _
        // Predicated region
        $region37: #{tpu_custom_call.1} parent=31 // pred_check
          %p189 = pneg %p63
        $region38: #{tpu_custom_call.1} parent=31 // pred_check_branch
          %191 = sbr.rel (%p189) target = $region40
        $region39: #{tpu_custom_call.1} parent=31 // pred_region
          %192 = dma.done [#allocation6], 4608
        $region40: #{tpu_custom_call.1} parent=31 // pred_fallthru
          _
        // Predicated region
        $region41: #{tpu_custom_call.1} parent=31 // pred_check
          %p193 = pneg %p84
        $region42: #{tpu_custom_call.1} parent=31 // pred_check_branch
          %195 = sbr.rel (%p193) target = $region44
        $region43: #{tpu_custom_call.1} parent=31 // pred_region
          %196 = dma.done [#allocation6], 640
        $region44: #{tpu_custom_call.1} parent=31 // pred_fallthru
          _
        %s197 = sand.u32 %s29, 1
        %s198 = scalar_lea.sflag [#allocation3], %s197
        %s199 = sand.u32 %s29, 1
        %s200 = smul.addr %s199, 8
        %s201 = scalar_lea.vmem [#allocation2], %s200
        %p202 = pneg %p42
        %p203 = pneg %p39
        %p204 = pneg %p63
        %p205 = pneg %p60
        %p206 = pneg %p84
        %p207 = pneg %p81
        %p208 = pneg %p110
        %p209 = pneg %p107
        %s210 = sand.u32 %s97, 1
        %s211 = scalar_lea.sflag [#allocation4], %s210
        %s212 = sand.u32 %s97, 1
        %s213 = smul.addr %s212, 8
        %s214 = scalar_lea.vmem [#allocation8], %s213
        %v216 = vlaneseq
        %v217 = vand.u32 %v216, 127
        %v218 = vlaneseq
        %v219 = vshrl.u32 %v218, 7
        %v220 = vmul.u32 %v219, 4
        %vm221 = vcmp.ge.s32.totalorder %v217, %v220
        %v222 = vadd.s32 %v219, 1
        %v223 = vmul.u32 %v222, 4
        %vm224 = vcmp.lt.s32.totalorder %v217, %v223
        %vm225 = vmand %vm221, %vm224
        %v226 = vsel %vm225, 1, 0
        %v227 = vcvt.s32.f32 %v226
        %v228 = vmul.f32 %v227, 0.5
        %v229 = vld [vmem:[%s184] sm:$0xff]
        %v230 = vld [vmem:[#allocation7] sm:$0xff]
        %v231 = vadd.f32 %v229, %v230
        %v232 = vld [vmem:[#allocation5] sm:$0xf]
        %v233 = vld [vmem:[#allocation5 + $0x4] sm:$0xf]
        %v234 = vld [vmem:[#allocation5 + $0x8] sm:$0xf]
        %v235 = vld [vmem:[#allocation5 + $0xc] sm:$0xf]
        %v236 = vld [vmem:[#allocation5 + $0x10] sm:$0xf]
        %v237 = vld [vmem:[#allocation5 + $0x14] sm:$0xf]
        %v238 = vld [vmem:[#allocation5 + $0x18] sm:$0xf]
        %v239 = vld [vmem:[#allocation5 + $0x1c] sm:$0xf]
        %v240 = vld [vmem:[#allocation5 + $0x20] sm:$0xf]
        %v241 = vld [vmem:[#allocation5 + $0x24] sm:$0xf]
        %v242 = vld [vmem:[#allocation5 + $0x28] sm:$0xf]
        %v243 = vld [vmem:[#allocation5 + $0x2c] sm:$0xf]
        %v244 = vld [vmem:[#allocation5 + $0x30] sm:$0xf]
        %v245 = vld [vmem:[#allocation5 + $0x34] sm:$0xf]
        %v246 = vld [vmem:[#allocation5 + $0x38] sm:$0xf]
        %v247 = vld [vmem:[#allocation5 + $0x3c] sm:$0xf]
        %v248 = vld [vmem:[#allocation5 + $0x40] sm:$0xf]
        %v249 = vld [vmem:[#allocation5 + $0x44] sm:$0xf]
        %v250 = vld [vmem:[#allocation5 + $0x48] sm:$0xf]
        %v251 = vld [vmem:[#allocation5 + $0x4c] sm:$0xf]
        %v252 = vld [vmem:[#allocation5 + $0x50] sm:$0xf]
        %v253 = vld [vmem:[#allocation5 + $0x54] sm:$0xf]
        %v254 = vld [vmem:[#allocation5 + $0x58] sm:$0xf]
        %v255 = vld [vmem:[#allocation5 + $0x5c] sm:$0xf]
        %v256 = vld [vmem:[#allocation5 + $0x60] sm:$0xf]
        %v257 = vld [vmem:[#allocation5 + $0x64] sm:$0xf]
        %v258 = vld [vmem:[#allocation5 + $0x68] sm:$0xf]
        %v259 = vld [vmem:[#allocation5 + $0x6c] sm:$0xf]
        %v260 = vld [vmem:[#allocation5 + $0x70] sm:$0xf]
        %v261 = vld [vmem:[#allocation5 + $0x74] sm:$0xf]
        %v262 = vld [vmem:[#allocation5 + $0x78] sm:$0xf]
        %v263 = vld [vmem:[#allocation5 + $0x7c] sm:$0xf]
        %v264 = vld [vmem:[#allocation5 + $0x80] sm:$0xf]
        %v265 = vld [vmem:[#allocation5 + $0x84] sm:$0xf]
        %v266 = vld [vmem:[#allocation5 + $0x88] sm:$0xf]
        %v267 = vld [vmem:[#allocation5 + $0x8c] sm:$0xf]
        %v268 = vld [vmem:[#allocation7 + $0x8] sm:$0x1]
        %v269 = vld [vmem:[#allocation7 + $0x9] sm:$0x1]
        %v270 = vld [vmem:[#allocation7 + $0xa] sm:$0x1]
        %v271 = vld [vmem:[#allocation7 + $0xb] sm:$0x1]
        %v272 = vld [vmem:[#allocation7 + $0xc] sm:$0x1]
        %v273 = vld [vmem:[#allocation7 + $0xd] sm:$0x1]
        %v274 = vld [vmem:[#allocation7 + $0xe] sm:$0x1]
        %v275 = vld [vmem:[#allocation7 + $0xf] sm:$0x1]
        %v276 = vld [vmem:[#allocation7 + $0x10] sm:$0x1]
        %v277 = vld [vmem:[#allocation7 + $0x11] sm:$0x1]
        %v278 = vpack.c.bf16 %v231, %v231
        %v279 = vlaneseq
        %v280 = vshrl.u32 %v279, 7
        %v281 = vsub.s32 0, %v280
        %v282 = vrot.slane %v268, %v281
        %v287 = vunpack.c.l.b16 %v232
        %v288 = vunpack.c.l.b16 %v233
        %v289 = vunpack.c.l.b16 %v234
        %v290 = vunpack.c.l.b16 %v235
        %v291 = vpack.c.b16 %v288, %v287
        %v292 = vpack.c.b16 %v290, %v289
        %vm295 = vcmask 261120
        %v297 = vsel %vm295, %v278, 0
        %299 = vmatprep.subr.bf16.mxu0 0
        %300 = vmatpush1.bf16.msra.mxu0 %v291
        %301 = vmatprep.subr.bf16.mxu0 0
        %302 = vmatpush1.bf16.msra.mxu0 %v292
        %303 = vmatprep.subr.bf16.mxu0 0
        %304 = vmatpush1.bf16.msra.mxu0 0
        %305 = vmatprep.subr.bf16.mxu0 0
        %306 = vmatpush1.bf16.msra.mxu0 0
        %307 = vmatprep.subr.bf16.mxu0 0
        %308 = vmatpush1.bf16.msra.mxu0 0
        %309 = vmatprep.subr.bf16.mxu0 0
        %310 = vmatpush1.bf16.msra.mxu0 0
        %311 = vmatprep.subr.bf16.mxu0 0
        %312 = vmatpush1.bf16.msra.mxu0 0
        %313 = vmatprep.subr.bf16.mxu0 0
        %314 = vmatpush1.bf16.msra.mxu0 0
        %315 = vmatprep.subr.bf16.mxu0 0
        %316 = vmatpush1.bf16.msra.mxu0 0
        %317 = vmatprep.subr.bf16.mxu0 0
        %318 = vmatpush1.bf16.msra.mxu0 0
        %319 = vmatprep.subr.bf16.mxu0 0
        %320 = vmatpush1.bf16.msra.mxu0 0
        %321 = vmatprep.subr.bf16.mxu0 0
        %322 = vmatpush1.bf16.msra.mxu0 0
        %323 = vmatprep.subr.bf16.mxu0 0
        %324 = vmatpush1.bf16.msra.mxu0 0
        %325 = vmatprep.subr.bf16.mxu0 0
        %326 = vmatpush1.bf16.msra.mxu0 0
        %327 = vmatprep.subr.bf16.mxu0 0
        %328 = vmatpush1.bf16.msra.mxu0 0
        %329 = vmatprep.subr.bf16.mxu0 0
        %330 = vmatpush1.bf16.msra.mxu0 0
        %331 = vmatprep.mubr.bf16.mxu0 0
        %332 = vmatmul.mubr.bf16.gmra.mrb[0].mxu0 %v297
        %v333 = vpop.f32.mrb[0].mxu0
        %v334 = vadd.f32 %v282, %v333
        %v335 = vpop.f32.mrb[0].mxu0
        %v336 = vpop.f32.mrb[0].mxu0
        %v337 = vpop.f32.mrb[0].mxu0
        %338 = vdwg.mxu0
        %v339 = vlaneseq
        %v340 = vshrl.u32 %v339, 7
        %v341 = vsub.s32 0, %v340
        %v342 = vrot.slane %v269, %v341
        %v347 = vunpack.c.l.b16 %v236
        %v348 = vunpack.c.l.b16 %v237
        %v349 = vunpack.c.l.b16 %v238
        %v350 = vunpack.c.l.b16 %v239
        %v351 = vpack.c.b16 %v348, %v347
        %v352 = vpack.c.b16 %v350, %v349
        %355 = vmatprep.subr.bf16.mxu0 0
        %356 = vmatpush1.bf16.msra.mxu0 %v351
        %357 = vmatprep.subr.bf16.mxu0 0
        %358 = vmatpush1.bf16.msra.mxu0 %v352
        %359 = vmatprep.subr.bf16.mxu0 0
        %360 = vmatpush1.bf16.msra.mxu0 0
        %361 = vmatprep.subr.bf16.mxu0 0
        %362 = vmatpush1.bf16.msra.mxu0 0
        %363 = vmatprep.subr.bf16.mxu0 0
        %364 = vmatpush1.bf16.msra.mxu0 0
        %365 = vmatprep.subr.bf16.mxu0 0
        %366 = vmatpush1.bf16.msra.mxu0 0
        %367 = vmatprep.subr.bf16.mxu0 0
        %368 = vmatpush1.bf16.msra.mxu0 0
        %369 = vmatprep.subr.bf16.mxu0 0
        %370 = vmatpush1.bf16.msra.mxu0 0
        %371 = vmatprep.subr.bf16.mxu0 0
        %372 = vmatpush1.bf16.msra.mxu0 0
        %373 = vmatprep.subr.bf16.mxu0 0
        %374 = vmatpush1.bf16.msra.mxu0 0
        %375 = vmatprep.subr.bf16.mxu0 0
        %376 = vmatpush1.bf16.msra.mxu0 0
        %377 = vmatprep.subr.bf16.mxu0 0
        %378 = vmatpush1.bf16.msra.mxu0 0
        %379 = vmatprep.subr.bf16.mxu0 0
        %380 = vmatpush1.bf16.msra.mxu0 0
        %381 = vmatprep.subr.bf16.mxu0 0
        %382 = vmatpush1.bf16.msra.mxu0 0
        %383 = vmatprep.subr.bf16.mxu0 0
        %384 = vmatpush1.bf16.msra.mxu0 0
        %385 = vmatprep.subr.bf16.mxu0 0
        %386 = vmatpush1.bf16.msra.mxu0 0
        %387 = vmatprep.mubr.bf16.mxu0 0
        %388 = vmatmul.mubr.bf16.gmra.mrb[0].mxu0 %v297
        %v389 = vpop.f32.mrb[0].mxu0
        %v390 = vadd.f32 %v342, %v389
        %v391 = vpop.f32.mrb[0].mxu0
        %v392 = vpop.f32.mrb[0].mxu0
        %v393 = vpop.f32.mrb[0].mxu0
        %394 = vdwg.mxu0
        %v395 = vlaneseq
        %v396 = vshrl.u32 %v395, 7
        %v397 = vsub.s32 0, %v396
        %v398 = vrot.slane %v270, %v397
        %v403 = vunpack.c.l.b16 %v240
        %v404 = vunpack.c.l.b16 %v241
        %v405 = vunpack.c.l.b16 %v242
        %v406 = vunpack.c.l.b16 %v243
        %v407 = vpack.c.b16 %v404, %v403
        %v408 = vpack.c.b16 %v406, %v405
        %411 = vmatprep.subr.bf16.mxu0 0
        %412 = vmatpush1.bf16.msra.mxu0 %v407
        %413 = vmatprep.subr.bf16.mxu0 0
        %414 = vmatpush1.bf16.msra.mxu0 %v408
        %415 = vmatprep.subr.bf16.mxu0 0
        %416 = vmatpush1.bf16.msra.mxu0 0
        %417 = vmatprep.subr.bf16.mxu0 0
        %418 = vmatpush1.bf16.msra.mxu0 0
        %419 = vmatprep.subr.bf16.mxu0 0
        %420 = vmatpush1.bf16.msra.mxu0 0
        %421 = vmatprep.subr.bf16.mxu0 0
        %422 = vmatpush1.bf16.msra.mxu0 0
        %423 = vmatprep.subr.bf16.mxu0 0
        %424 = vmatpush1.bf16.msra.mxu0 0
        %425 = vmatprep.subr.bf16.mxu0 0
        %426 = vmatpush1.bf16.msra.mxu0 0
        %427 = vmatprep.subr.bf16.mxu0 0
        %428 = vmatpush1.bf16.msra.mxu0 0
        %429 = vmatprep.subr.bf16.mxu0 0
        %430 = vmatpush1.bf16.msra.mxu0 0
        %431 = vmatprep.subr.bf16.mxu0 0
        %432 = vmatpush1.bf16.msra.mxu0 0
        %433 = vmatprep.subr.bf16.mxu0 0
        %434 = vmatpush1.bf16.msra.mxu0 0
        %435 = vmatprep.subr.bf16.mxu0 0
        %436 = vmatpush1.bf16.msra.mxu0 0
        %437 = vmatprep.subr.bf16.mxu0 0
        %438 = vmatpush1.bf16.msra.mxu0 0
        %439 = vmatprep.subr.bf16.mxu0 0
        %440 = vmatpush1.bf16.msra.mxu0 0
        %441 = vmatprep.subr.bf16.mxu0 0
        %442 = vmatpush1.bf16.msra.mxu0 0
        %443 = vmatprep.mubr.bf16.mxu0 0
        %444 = vmatmul.mubr.bf16.gmra.mrb[0].mxu0 %v297
        %v445 = vpop.f32.mrb[0].mxu0
        %v446 = vadd.f32 %v398, %v445
        %v447 = vpop.f32.mrb[0].mxu0
        %v448 = vpop.f32.mrb[0].mxu0
        %v449 = vpop.f32.mrb[0].mxu0
        %450 = vdwg.mxu0
        %v452 = vcombine.high %v334, %v334
        %v454 = vunpack.c.l.s4 1966171168
        %v455 = vunpack.c.0.s8 %v454
        %v456 = vlaneseq
        %v457 = vshrl.u32 %v456, 7
        %v458 = vsub.s32 %v455, %v457
        %v459 = vrot.slane %v334, %v458
        %v461 = vunpack.c.l.s4 1966171168
        %v462 = vunpack.c.0.s8 %v461
        %v463 = vlaneseq
        %v464 = vshrl.u32 %v463, 7
        %v465 = vsub.s32 %v462, %v464
        %v466 = vrot.slane %v452, %v465
        %v467 = vcombine.high %v459, %v459
        %v468 = vcombine.high %v466, %v466
        %v470 = vunpack.c.l.s4 1966171168
        %v471 = vunpack.c.0.s8 %v470
        %v472 = vlaneseq
        %v473 = vshrl.u32 %v472, 7
        %v474 = vsub.s32 %v471, %v473
        %v475 = vrot.slane %v459, %v474
        %v477 = vunpack.c.l.s4 1966171168
        %v478 = vunpack.c.0.s8 %v477
        %v479 = vlaneseq
        %v480 = vshrl.u32 %v479, 7
        %v481 = vsub.s32 %v478, %v480
        %v482 = vrot.slane %v466, %v481
        %v484 = vunpack.c.l.s4 1966171168
        %v485 = vunpack.c.0.s8 %v484
        %v486 = vlaneseq
        %v487 = vshrl.u32 %v486, 7
        %v488 = vsub.s32 %v485, %v487
        %v489 = vrot.slane %v467, %v488
        %v491 = vunpack.c.l.s4 1966171168
        %v492 = vunpack.c.0.s8 %v491
        %v493 = vlaneseq
        %v494 = vshrl.u32 %v493, 7
        %v495 = vsub.s32 %v492, %v494
        %v496 = vrot.slane %v468, %v495
        %v497 = vcombine.high %v475, %v475
        %v498 = vcombine.high %v482, %v482
        %v499 = vcombine.high %v489, %v489
        %v500 = vcombine.high %v496, %v496
        %v501 = vlaneseq
        %v502 = vshrl.u32 %v501, 7
        %v503 = vsub.s32 0, %v502
        %v504 = vrot.slane %v475, %v503
        %v505 = vlaneseq
        %v506 = vshrl.u32 %v505, 7
        %v507 = vsub.s32 0, %v506
        %v508 = vrot.slane %v489, %v507
        %v509 = vlaneseq
        %v510 = vshrl.u32 %v509, 7
        %v511 = vsub.s32 0, %v510
        %v512 = vrot.slane %v497, %v511
        %v513 = vlaneseq
        %v514 = vshrl.u32 %v513, 7
        %v515 = vsub.s32 0, %v514
        %v516 = vrot.slane %v499, %v515
        %v517 = vlaneseq
        %v518 = vshrl.u32 %v517, 7
        %v519 = vsub.s32 0, %v518
        %v520 = vrot.slane %v482, %v519
        %v521 = vlaneseq
        %v522 = vshrl.u32 %v521, 7
        %v523 = vsub.s32 0, %v522
        %v524 = vrot.slane %v496, %v523
        %v525 = vlaneseq
        %v526 = vshrl.u32 %v525, 7
        %v527 = vsub.s32 0, %v526
        %v528 = vrot.slane %v498, %v527
        %v529 = vlaneseq
        %v530 = vshrl.u32 %v529, 7
        %v531 = vsub.s32 0, %v530
        %v532 = vrot.slane %v500, %v531
        %v541 = vmul.f32 %v504, %v228
        %v542 = vmul.f32 %v508, %v228
        %v543 = vmul.f32 %v512, %v228
        %v544 = vmul.f32 %v516, %v228
        %v545 = vmul.f32 %v520, %v228
        %v546 = vmul.f32 %v524, %v228
        %v547 = vmul.f32 %v528, %v228
        %v548 = vmul.f32 %v532, %v228
        %v549 = vpack.c.bf16 %v542, %v541
        %v550 = vpack.c.bf16 %v544, %v543
        %v551 = vpack.c.bf16 %v546, %v545
        %v552 = vpack.c.bf16 %v548, %v547
        %v553 = vpack.c.bf16 %v390, %v390
        %v555 = vsel %vm295, %v549, 0
        %v558 = vsel %vm295, %v550, 0
        %v561 = vsel %vm295, %v551, 0
        %v564 = vsel %vm295, %v552, 0
        %v567 = vsel %vm295, %v553, 0
        %569 = vmatprep.subr.bf16.mxu0 0
        %570 = vmatpush1.bf16.xpose.msra.mxu0 %v567
        %571 = vmatprep.subr.bf16.mxu0 0
        %572 = vmatpush1.bf16.xpose.msra.mxu0 0
        %573 = vmatprep.subr.bf16.mxu0 0
        %574 = vmatpush1.bf16.xpose.msra.mxu0 0
        %575 = vmatprep.subr.bf16.mxu0 0
        %576 = vmatpush1.bf16.xpose.msra.mxu0 0
        %577 = vmatprep.subr.bf16.mxu0 0
        %578 = vmatpush1.bf16.xpose.msra.mxu0 0
        %579 = vmatprep.subr.bf16.mxu0 0
        %580 = vmatpush1.bf16.xpose.msra.mxu0 0
        %581 = vmatprep.subr.bf16.mxu0 0
        %582 = vmatpush1.bf16.xpose.msra.mxu0 0
        %583 = vmatprep.subr.bf16.mxu0 0
        %584 = vmatpush1.bf16.xpose.msra.mxu0 0
        %585 = vmatprep.subr.bf16.mxu0 0
        %586 = vmatpush1.bf16.xpose.msra.mxu0 0
        %587 = vmatprep.subr.bf16.mxu0 0
        %588 = vmatpush1.bf16.xpose.msra.mxu0 0
        %589 = vmatprep.subr.bf16.mxu0 0
        %590 = vmatpush1.bf16.xpose.msra.mxu0 0
        %591 = vmatprep.subr.bf16.mxu0 0
        %592 = vmatpush1.bf16.xpose.msra.mxu0 0
        %593 = vmatprep.subr.bf16.mxu0 0
        %594 = vmatpush1.bf16.xpose.msra.mxu0 0
        %595 = vmatprep.subr.bf16.mxu0 0
        %596 = vmatpush1.bf16.xpose.msra.mxu0 0
        %597 = vmatprep.subr.bf16.mxu0 0
        %598 = vmatpush1.bf16.xpose.msra.mxu0 0
        %599 = vmatprep.subr.bf16.mxu0 0
        %600 = vmatpush1.bf16.xpose.msra.mxu0 0
        %601 = vmatprep.mubr.bf16.mxu0 0
        %602 = vmatmul.mubr.bf16.gmra.mrb[0].mxu0 %v555
        %v603 = vpop.f32.mrb[0].mxu0
        %v604 = vadd.f32 0.0, %v603
        %v605 = vpop.f32.mrb[0].mxu0
        %v606 = vpop.f32.mrb[0].mxu0
        %v607 = vadd.f32 0.0, %v606
        %v608 = vpop.f32.mrb[0].mxu0
        %609 = vmatprep.mubr.bf16.mxu0 0
        %610 = vmatmul.mubr.bf16.gmra.mrb[0].mxu0 %v558
        %v611 = vpop.f32.mrb[0].mxu0
        %v612 = vadd.f32 0.0, %v611
        %v613 = vpop.f32.mrb[0].mxu0
        %v614 = vpop.f32.mrb[0].mxu0
        %v615 = vadd.f32 0.0, %v614
        %v616 = vpop.f32.mrb[0].mxu0
        %617 = vmatprep.mubr.bf16.mxu0 0
        %618 = vmatmul.mubr.bf16.gmra.mrb[0].mxu0 %v561
        %v619 = vpop.f32.mrb[0].mxu0
        %v620 = vadd.f32 0.0, %v619
        %v621 = vpop.f32.mrb[0].mxu0
        %v622 = vpop.f32.mrb[0].mxu0
        %v623 = vadd.f32 0.0, %v622
        %v624 = vpop.f32.mrb[0].mxu0
        %625 = vmatprep.mubr.bf16.mxu0 0
        %626 = vmatmul.mubr.bf16.gmra.mrb[0].mxu0 %v564
        %v627 = vpop.f32.mrb[0].mxu0
        %v628 = vadd.f32 0.0, %v627
        %v629 = vpop.f32.mrb[0].mxu0
        %v630 = vpop.f32.mrb[0].mxu0
        %v631 = vadd.f32 0.0, %v630
        %v632 = vpop.f32.mrb[0].mxu0
        %633 = vdwg.mxu0
        %vm634 = vcmask 64512
        %v635 = vsel %vm634, %v604, -inf
        %636 = vmax.xlane.f32.xlu0 %v635
        %v637 = vpop.xlane.xlu0 %636
        %v638 = vsel %vm634, %v607, -inf
        %639 = vmax.xlane.f32.xlu0 %v638
        %v640 = vpop.xlane.xlu0 %639
        %v641 = vsel %vm634, %v612, -inf
        %642 = vmax.xlane.f32.xlu0 %v641
        %v643 = vpop.xlane.xlu0 %642
        %v644 = vsel %vm634, %v615, -inf
        %645 = vmax.xlane.f32.xlu0 %v644
        %v646 = vpop.xlane.xlu0 %645
        %v647 = vsel %vm634, %v620, -inf
        %648 = vmax.xlane.f32.xlu0 %v647
        %v649 = vpop.xlane.xlu0 %648
        %v650 = vsel %vm634, %v623, -inf
        %651 = vmax.xlane.f32.xlu0 %v650
        %v652 = vpop.xlane.xlu0 %651
        %v653 = vsel %vm634, %v628, -inf
        %654 = vmax.xlane.f32.xlu0 %v653
        %v655 = vpop.xlane.xlu0 %654
        %v656 = vsel %vm634, %v631, -inf
        %657 = vmax.xlane.f32.xlu0 %v656
        %v658 = vpop.xlane.xlu0 %657
        %v659 = vsub.f32 %v604, %v637
        %v660 = vsub.f32 %v607, %v640
        %v661 = vsub.f32 %v612, %v643
        %v662 = vsub.f32 %v615, %v646
        %v663 = vsub.f32 %v620, %v649
        %v664 = vsub.f32 %v623, %v652
        %v665 = vsub.f32 %v628, %v655
        %v666 = vsub.f32 %v631, %v658
        %v667 = vmul.f32 %v659, 1.442695
        %v668 = vpow.pop %v667
        %v669 = vmul.f32 %v660, 1.442695
        %v670 = vpow.pop %v669
        %v671 = vmul.f32 %v661, 1.442695
        %v672 = vpow.pop %v671
        %v673 = vmul.f32 %v662, 1.442695
        %v674 = vpow.pop %v673
        %v675 = vmul.f32 %v663, 1.442695
        %v676 = vpow.pop %v675
        %v677 = vmul.f32 %v664, 1.442695
        %v678 = vpow.pop %v677
        %v679 = vmul.f32 %v665, 1.442695
        %v680 = vpow.pop %v679
        %v681 = vmul.f32 %v666, 1.442695
        %v682 = vpow.pop %v681
        %v683 = vsel %vm634, %v668, 0.0
        %684 = vadd.xlane.f32.xlu0 %v683
        %v685 = vpop.xlane.xlu0 %684
        %v686 = vsel %vm634, %v670, 0.0
        %687 = vadd.xlane.f32.xlu0 %v686
        %v688 = vpop.xlane.xlu0 %687
        %v689 = vsel %vm634, %v672, 0.0
        %690 = vadd.xlane.f32.xlu0 %v689
        %v691 = vpop.xlane.xlu0 %690
        %v692 = vsel %vm634, %v674, 0.0
        %693 = vadd.xlane.f32.xlu0 %v692
        %v694 = vpop.xlane.xlu0 %693
        %v695 = vsel %vm634, %v676, 0.0
        %696 = vadd.xlane.f32.xlu0 %v695
        %v697 = vpop.xlane.xlu0 %696
        %v698 = vsel %vm634, %v678, 0.0
        %699 = vadd.xlane.f32.xlu0 %v698
        %v700 = vpop.xlane.xlu0 %699
        %v701 = vsel %vm634, %v680, 0.0
        %702 = vadd.xlane.f32.xlu0 %v701
        %v703 = vpop.xlane.xlu0 %702
        %v704 = vsel %vm634, %v682, 0.0
        %705 = vadd.xlane.f32.xlu0 %v704
        %v706 = vpop.xlane.xlu0 %705
        %v707 = vrcp.pop %v685
        %v708 = vmul.f32 %v668, %v707
        %v709 = vrcp.pop %v688
        %v710 = vmul.f32 %v670, %v709
        %v711 = vrcp.pop %v691
        %v712 = vmul.f32 %v672, %v711
        %v713 = vrcp.pop %v694
        %v714 = vmul.f32 %v674, %v713
        %v715 = vrcp.pop %v697
        %v716 = vmul.f32 %v676, %v715
        %v717 = vrcp.pop %v700
        %v718 = vmul.f32 %v678, %v717
        %v719 = vrcp.pop %v703
        %v720 = vmul.f32 %v680, %v719
        %v721 = vrcp.pop %v706
        %v722 = vmul.f32 %v682, %v721
        %v723 = vpack.c.bf16 %v710, %v708
        %v724 = vpack.c.bf16 %v714, %v712
        %v725 = vpack.c.bf16 %v718, %v716
        %v726 = vpack.c.bf16 %v722, %v720
        %v727 = vpack.c.bf16 %v446, %v446
        %v729 = vsel %vm634, %v723, 0
        %v732 = vsel %vm634, %v724, 0
        %v735 = vsel %vm634, %v725, 0
        %v738 = vsel %vm634, %v726, 0
        %vm740 = vcmask 1043456
        %v742 = vsel %vm740, %v727, 0
        %744 = vmatprep.subr.bf16.mxu0 0
        %745 = vmatpush1.bf16.msra.mxu0 %v742
        %746 = vmatprep.subr.bf16.mxu0 0
        %747 = vmatpush1.bf16.msra.mxu0 0
        %748 = vmatprep.subr.bf16.mxu0 0
        %749 = vmatpush1.bf16.msra.mxu0 0
        %750 = vmatprep.subr.bf16.mxu0 0
        %751 = vmatpush1.bf16.msra.mxu0 0
        %752 = vmatprep.subr.bf16.mxu0 0
        %753 = vmatpush1.bf16.msra.mxu0 0
        %754 = vmatprep.subr.bf16.mxu0 0
        %755 = vmatpush1.bf16.msra.mxu0 0
        %756 = vmatprep.subr.bf16.mxu0 0
        %757 = vmatpush1.bf16.msra.mxu0 0
        %758 = vmatprep.subr.bf16.mxu0 0
        %759 = vmatpush1.bf16.msra.mxu0 0
        %760 = vmatprep.subr.bf16.mxu0 0
        %761 = vmatpush1.bf16.msra.mxu0 0
        %762 = vmatprep.subr.bf16.mxu0 0
        %763 = vmatpush1.bf16.msra.mxu0 0
        %764 = vmatprep.subr.bf16.mxu0 0
        %765 = vmatpush1.bf16.msra.mxu0 0
        %766 = vmatprep.subr.bf16.mxu0 0
        %767 = vmatpush1.bf16.msra.mxu0 0
        %768 = vmatprep.subr.bf16.mxu0 0
        %769 = vmatpush1.bf16.msra.mxu0 0
        %770 = vmatprep.subr.bf16.mxu0 0
        %771 = vmatpush1.bf16.msra.mxu0 0
        %772 = vmatprep.subr.bf16.mxu0 0
        %773 = vmatpush1.bf16.msra.mxu0 0
        %774 = vmatprep.subr.bf16.mxu0 0
        %775 = vmatpush1.bf16.msra.mxu0 0
        %776 = vmatprep.mubr.bf16.mxu0 0
        %777 = vmatmul.mubr.bf16.gmra.mrb[0].mxu0 %v729
        %v778 = vpop.f32.mrb[0].mxu0
        %v779 = vadd.f32 0.0, %v778
        %v780 = vpop.f32.mrb[0].mxu0
        %v781 = vpop.f32.mrb[0].mxu0
        %v782 = vadd.f32 0.0, %v781
        %v783 = vpop.f32.mrb[0].mxu0
        %784 = vmatprep.mubr.bf16.mxu0 0
        %785 = vmatmul.mubr.bf16.gmra.mrb[0].mxu0 %v732
        %v786 = vpop.f32.mrb[0].mxu0
        %v787 = vadd.f32 0.0, %v786
        %v788 = vpop.f32.mrb[0].mxu0
        %v789 = vpop.f32.mrb[0].mxu0
        %v790 = vadd.f32 0.0, %v789
        %v791 = vpop.f32.mrb[0].mxu0
        %792 = vmatprep.mubr.bf16.mxu0 0
        %793 = vmatmul.mubr.bf16.gmra.mrb[0].mxu0 %v735
        %v794 = vpop.f32.mrb[0].mxu0
        %v795 = vadd.f32 0.0, %v794
        %v796 = vpop.f32.mrb[0].mxu0
        %v797 = vpop.f32.mrb[0].mxu0
        %v798 = vadd.f32 0.0, %v797
        %v799 = vpop.f32.mrb[0].mxu0
        %800 = vmatprep.mubr.bf16.mxu0 0
        %801 = vmatmul.mubr.bf16.gmra.mrb[0].mxu0 %v738
        %v802 = vpop.f32.mrb[0].mxu0
        %v803 = vadd.f32 0.0, %v802
        %v804 = vpop.f32.mrb[0].mxu0
        %v805 = vpop.f32.mrb[0].mxu0
        %v806 = vadd.f32 0.0, %v805
        %v807 = vpop.f32.mrb[0].mxu0
        %808 = vdwg.mxu0
        %v809 = vmul.f32 %v779, %v227
        %v810 = vmul.f32 %v782, %v227
        %v811 = vmul.f32 %v787, %v227
        %v812 = vmul.f32 %v790, %v227
        %v813 = vmul.f32 %v795, %v227
        %v814 = vmul.f32 %v798, %v227
        %v815 = vmul.f32 %v803, %v227
        %v816 = vmul.f32 %v806, %v227
        %v817 = vsel %vm295, %v809, 0.0
        %v818 = vrot.slane %v817, 4
        %v819 = vadd.f32 %v817, %v818
        %v820 = vrot.slane %v819, 2
        %v821 = vadd.f32 %v819, %v820
        %v822 = vrot.slane %v821, 1
        %v823 = vadd.f32 %v821, %v822
        %v824 = vsel %vm295, %v810, 0.0
        %v825 = vrot.slane %v824, 4
        %v826 = vadd.f32 %v824, %v825
        %v827 = vrot.slane %v826, 2
        %v828 = vadd.f32 %v826, %v827
        %v829 = vrot.slane %v828, 1
        %v830 = vadd.f32 %v828, %v829
        %v831 = vsel %vm295, %v811, 0.0
        %v832 = vrot.slane %v831, 4
        %v833 = vadd.f32 %v831, %v832
        %v834 = vrot.slane %v833, 2
        %v835 = vadd.f32 %v833, %v834
        %v836 = vrot.slane %v835, 1
        %v837 = vadd.f32 %v835, %v836
        %v838 = vsel %vm295, %v812, 0.0
        %v839 = vrot.slane %v838, 4
        %v840 = vadd.f32 %v838, %v839
        %v841 = vrot.slane %v840, 2
        %v842 = vadd.f32 %v840, %v841
        %v843 = vrot.slane %v842, 1
        %v844 = vadd.f32 %v842, %v843
        %v845 = vsel %vm295, %v813, 0.0
        %v846 = vrot.slane %v845, 4
        %v847 = vadd.f32 %v845, %v846
        %v848 = vrot.slane %v847, 2
        %v849 = vadd.f32 %v847, %v848
        %v850 = vrot.slane %v849, 1
        %v851 = vadd.f32 %v849, %v850
        %v852 = vsel %vm295, %v814, 0.0
        %v853 = vrot.slane %v852, 4
        %v854 = vadd.f32 %v852, %v853
        %v855 = vrot.slane %v854, 2
        %v856 = vadd.f32 %v854, %v855
        %v857 = vrot.slane %v856, 1
        %v858 = vadd.f32 %v856, %v857
        %v859 = vsel %vm295, %v815, 0.0
        %v860 = vrot.slane %v859, 4
        %v861 = vadd.f32 %v859, %v860
        %v862 = vrot.slane %v861, 2
        %v863 = vadd.f32 %v861, %v862
        %v864 = vrot.slane %v863, 1
        %v865 = vadd.f32 %v863, %v864
        %v866 = vsel %vm295, %v816, 0.0
        %v867 = vrot.slane %v866, 4
        %v868 = vadd.f32 %v866, %v867
        %v869 = vrot.slane %v868, 2
        %v870 = vadd.f32 %v868, %v869
        %v871 = vrot.slane %v870, 1
        %v872 = vadd.f32 %v870, %v871
        %v873 = vpack.c.bf16 %v823, %v823
        %v874 = vpack.c.bf16 %v830, %v830
        %v875 = vpack.c.bf16 %v837, %v837
        %v876 = vpack.c.bf16 %v844, %v844
        %v877 = vpack.c.bf16 %v851, %v851
        %v878 = vpack.c.bf16 %v858, %v858
        %v879 = vpack.c.bf16 %v865, %v865
        %v880 = vpack.c.bf16 %v872, %v872
        %v881 = vlaneseq
        %v882 = vshrl.u32 %v881, 7
        %v883 = vsub.s32 0, %v882
        %v884 = vrot.slane %v271, %v883
        %v893 = vunpack.c.l.b16 %v873
        %v894 = vunpack.c.l.b16 %v874
        %v895 = vunpack.c.l.b16 %v875
        %v896 = vunpack.c.l.b16 %v876
        %v897 = vunpack.c.l.b16 %v877
        %v898 = vunpack.c.l.b16 %v878
        %v899 = vunpack.c.l.b16 %v879
        %v900 = vunpack.c.l.b16 %v880
        %vm901 = vcmask 1041409
        %v902 = vsel %vm901, %v894, %v893
        %vm903 = vcmask 1042434
        %v904 = vsel %vm903, %v895, %v902
        %vm905 = vcmask 1043459
        %v906 = vsel %vm905, %v896, %v904
        %vm907 = vcmask 1044484
        %v908 = vsel %vm907, %v897, %v906
        %vm909 = vcmask 1045509
        %v910 = vsel %vm909, %v898, %v908
        %vm911 = vcmask 1046534
        %v912 = vsel %vm911, %v899, %v910
        %vm913 = vcmask 1047559
        %v914 = vsel %vm913, %v900, %v912
        %v915 = vpack.c.b16 %v914, %v914
        %v920 = vunpack.c.l.b16 %v244
        %v921 = vunpack.c.l.b16 %v245
        %v922 = vunpack.c.l.b16 %v246
        %v923 = vunpack.c.l.b16 %v247
        %v924 = vpack.c.b16 %v921, %v920
        %v925 = vpack.c.b16 %v923, %v922
        %v929 = vsel %vm295, %v915, 0
        %931 = vmatprep.subr.bf16.mxu0 0
        %932 = vmatpush1.bf16.msra.mxu0 %v924
        %933 = vmatprep.subr.bf16.mxu0 0
        %934 = vmatpush1.bf16.msra.mxu0 %v925
        %935 = vmatprep.subr.bf16.mxu0 0
        %936 = vmatpush1.bf16.msra.mxu0 0
        %937 = vmatprep.subr.bf16.mxu0 0
        %938 = vmatpush1.bf16.msra.mxu0 0
        %939 = vmatprep.subr.bf16.mxu0 0
        %940 = vmatpush1.bf16.msra.mxu0 0
        %941 = vmatprep.subr.bf16.mxu0 0
        %942 = vmatpush1.bf16.msra.mxu0 0
        %943 = vmatprep.subr.bf16.mxu0 0
        %944 = vmatpush1.bf16.msra.mxu0 0
        %945 = vmatprep.subr.bf16.mxu0 0
        %946 = vmatpush1.bf16.msra.mxu0 0
        %947 = vmatprep.subr.bf16.mxu0 0
        %948 = vmatpush1.bf16.msra.mxu0 0
        %949 = vmatprep.subr.bf16.mxu0 0
        %950 = vmatpush1.bf16.msra.mxu0 0
        %951 = vmatprep.subr.bf16.mxu0 0
        %952 = vmatpush1.bf16.msra.mxu0 0
        %953 = vmatprep.subr.bf16.mxu0 0
        %954 = vmatpush1.bf16.msra.mxu0 0
        %955 = vmatprep.subr.bf16.mxu0 0
        %956 = vmatpush1.bf16.msra.mxu0 0
        %957 = vmatprep.subr.bf16.mxu0 0
        %958 = vmatpush1.bf16.msra.mxu0 0
        %959 = vmatprep.subr.bf16.mxu0 0
        %960 = vmatpush1.bf16.msra.mxu0 0
        %961 = vmatprep.subr.bf16.mxu0 0
        %962 = vmatpush1.bf16.msra.mxu0 0
        %963 = vmatprep.mubr.bf16.mxu0 0
        %964 = vmatmul.mubr.bf16.gmra.mrb[0].mxu0 %v929
        %v965 = vpop.f32.mrb[0].mxu0
        %v966 = vadd.f32 %v884, %v965
        %v967 = vpop.f32.mrb[0].mxu0
        %v968 = vpop.f32.mrb[0].mxu0
        %v969 = vpop.f32.mrb[0].mxu0
        %970 = vdwg.mxu0
        %v971 = vadd.f32 %v231, %v966
        %v972 = vsel %vm295, %v971, 0.0
        %973 = vadd.xlane.f32.xlu0 %v972
        %v974 = vpop.xlane.xlu0 %973
        %v975 = vrcp.pop 32.0
        %v976 = vmul.f32 %v974, %v975
        %v977 = vsub.f32 %v971, %v976
        %v978 = vmul.f32 %v977, %v977
        %v979 = vsel %vm295, %v978, 0.0
        %980 = vadd.xlane.f32.xlu0 %v979
        %v981 = vpop.xlane.xlu0 %980
        %v982 = vmul.f32 %v981, %v975
        %v983 = vadd.f32 %v982, 1e-05
        %v984 = vrsqrt.pop %v983
        %v985 = vmul.f32 %v977, %v984
        %v986 = vlaneseq
        %v987 = vshrl.u32 %v986, 7
        %v988 = vsub.s32 0, %v987
        %v989 = vrot.slane %v272, %v988
        %v990 = vmul.f32 %v985, %v989
        %v991 = vlaneseq
        %v992 = vshrl.u32 %v991, 7
        %v993 = vsub.s32 0, %v992
        %v994 = vrot.slane %v273, %v993
        %v995 = vadd.f32 %v990, %v994
        %v996 = vpack.c.bf16 %v995, %v995
        %v997 = vlaneseq
        %v998 = vshrl.u32 %v997, 7
        %v999 = vsub.s32 0, %v998
        %v1000 = vrot.slane %v274, %v999
        %v1005 = vunpack.c.l.b16 %v248
        %v1006 = vunpack.c.l.b16 %v249
        %v1007 = vunpack.c.l.b16 %v250
        %v1008 = vunpack.c.l.b16 %v251
        %v1009 = vpack.c.b16 %v1006, %v1005
        %v1010 = vpack.c.b16 %v1008, %v1007
        %v1014 = vsel %vm295, %v996, 0
        %1016 = vmatprep.subr.bf16.mxu0 0
        %1017 = vmatpush1.bf16.msra.mxu0 %v1009
        %1018 = vmatprep.subr.bf16.mxu0 0
        %1019 = vmatpush1.bf16.msra.mxu0 %v1010
        %1020 = vmatprep.subr.bf16.mxu0 0
        %1021 = vmatpush1.bf16.msra.mxu0 0
        %1022 = vmatprep.subr.bf16.mxu0 0
        %1023 = vmatpush1.bf16.msra.mxu0 0
        %1024 = vmatprep.subr.bf16.mxu0 0
        %1025 = vmatpush1.bf16.msra.mxu0 0
        %1026 = vmatprep.subr.bf16.mxu0 0
        %1027 = vmatpush1.bf16.msra.mxu0 0
        %1028 = vmatprep.subr.bf16.mxu0 0
        %1029 = vmatpush1.bf16.msra.mxu0 0
        %1030 = vmatprep.subr.bf16.mxu0 0
        %1031 = vmatpush1.bf16.msra.mxu0 0
        %1032 = vmatprep.subr.bf16.mxu0 0
        %1033 = vmatpush1.bf16.msra.mxu0 0
        %1034 = vmatprep.subr.bf16.mxu0 0
        %1035 = vmatpush1.bf16.msra.mxu0 0
        %1036 = vmatprep.subr.bf16.mxu0 0
        %1037 = vmatpush1.bf16.msra.mxu0 0
        %1038 = vmatprep.subr.bf16.mxu0 0
        %1039 = vmatpush1.bf16.msra.mxu0 0
        %1040 = vmatprep.subr.bf16.mxu0 0
        %1041 = vmatpush1.bf16.msra.mxu0 0
        %1042 = vmatprep.subr.bf16.mxu0 0
        %1043 = vmatpush1.bf16.msra.mxu0 0
        %1044 = vmatprep.subr.bf16.mxu0 0
        %1045 = vmatpush1.bf16.msra.mxu0 0
        %1046 = vmatprep.subr.bf16.mxu0 0
        %1047 = vmatpush1.bf16.msra.mxu0 0
        %1048 = vmatprep.mubr.bf16.mxu0 0
        %1049 = vmatmul.mubr.bf16.gmra.mrb[0].mxu0 %v1014
        %v1050 = vpop.f32.mrb[0].mxu0
        %v1051 = vadd.f32 %v1000, %v1050
        %v1052 = vpop.f32.mrb[0].mxu0
        %v1053 = vpop.f32.mrb[0].mxu0
        %v1054 = vpop.f32.mrb[0].mxu0
        %1055 = vdwg.mxu0
        %v1056 = vmax.f32 %v1051, 0.0
        %v1057 = vpack.c.bf16 %v1056, %v1056
        %v1058 = vlaneseq
        %v1059 = vshrl.u32 %v1058, 7
        %v1060 = vsub.s32 0, %v1059
        %v1061 = vrot.slane %v275, %v1060
        %v1078 = vunpack.c.l.b16 %v252
        %v1079 = vunpack.c.l.b16 %v253
        %v1080 = vunpack.c.l.b16 %v254
        %v1081 = vunpack.c.l.b16 %v255
        %v1082 = vunpack.c.l.b16 %v256
        %v1083 = vunpack.c.l.b16 %v257
        %v1084 = vunpack.c.l.b16 %v258
        %v1085 = vunpack.c.l.b16 %v259
        %v1086 = vunpack.c.l.b16 %v260
        %v1087 = vunpack.c.l.b16 %v261
        %v1088 = vunpack.c.l.b16 %v262
        %v1089 = vunpack.c.l.b16 %v263
        %v1090 = vunpack.c.l.b16 %v264
        %v1091 = vunpack.c.l.b16 %v265
        %v1092 = vunpack.c.l.b16 %v266
        %v1093 = vunpack.c.l.b16 %v267
        %v1094 = vpack.c.b16 %v1079, %v1078
        %v1095 = vpack.c.b16 %v1081, %v1080
        %v1096 = vpack.c.b16 %v1083, %v1082
        %v1097 = vpack.c.b16 %v1085, %v1084
        %v1098 = vpack.c.b16 %v1087, %v1086
        %v1099 = vpack.c.b16 %v1089, %v1088
        %v1100 = vpack.c.b16 %v1091, %v1090
        %v1101 = vpack.c.b16 %v1093, %v1092
        %1110 = vmatprep.subr.bf16.mxu0 0
        %1111 = vmatpush1.bf16.msra.mxu0 %v1094
        %1112 = vmatprep.subr.bf16.mxu0 0
        %1113 = vmatpush1.bf16.msra.mxu0 %v1095
        %1114 = vmatprep.subr.bf16.mxu0 0
        %1115 = vmatpush1.bf16.msra.mxu0 %v1096
        %1116 = vmatprep.subr.bf16.mxu0 0
        %1117 = vmatpush1.bf16.msra.mxu0 %v1097
        %1118 = vmatprep.subr.bf16.mxu0 0
        %1119 = vmatpush1.bf16.msra.mxu0 %v1098
        %1120 = vmatprep.subr.bf16.mxu0 0
        %1121 = vmatpush1.bf16.msra.mxu0 %v1099
        %1122 = vmatprep.subr.bf16.mxu0 0
        %1123 = vmatpush1.bf16.msra.mxu0 %v1100
        %1124 = vmatprep.subr.bf16.mxu0 0
        %1125 = vmatpush1.bf16.msra.mxu0 %v1101
        %1126 = vmatprep.subr.bf16.mxu0 0
        %1127 = vmatpush1.bf16.msra.mxu0 0
        %1128 = vmatprep.subr.bf16.mxu0 0
        %1129 = vmatpush1.bf16.msra.mxu0 0
        %1130 = vmatprep.subr.bf16.mxu0 0
        %1131 = vmatpush1.bf16.msra.mxu0 0
        %1132 = vmatprep.subr.bf16.mxu0 0
        %1133 = vmatpush1.bf16.msra.mxu0 0
        %1134 = vmatprep.subr.bf16.mxu0 0
        %1135 = vmatpush1.bf16.msra.mxu0 0
        %1136 = vmatprep.subr.bf16.mxu0 0
        %1137 = vmatpush1.bf16.msra.mxu0 0
        %1138 = vmatprep.subr.bf16.mxu0 0
        %1139 = vmatpush1.bf16.msra.mxu0 0
        %1140 = vmatprep.subr.bf16.mxu0 0
        %1141 = vmatpush1.bf16.msra.mxu0 0
        %1142 = vmatprep.mubr.bf16.mxu0 0
        %1143 = vmatmul.mubr.bf16.gmra.mrb[0].mxu0 %v1057
        %v1144 = vpop.f32.mrb[0].mxu0
        %v1145 = vadd.f32 %v1061, %v1144
        %v1146 = vpop.f32.mrb[0].mxu0
        %v1147 = vpop.f32.mrb[0].mxu0
        %v1148 = vpop.f32.mrb[0].mxu0
        %1149 = vdwg.mxu0
        %v1150 = vadd.f32 %v995, %v1145
        %v1151 = vsel %vm295, %v1150, 0.0
        %1152 = vadd.xlane.f32.xlu0 %v1151
        %v1153 = vpop.xlane.xlu0 %1152
        %v1154 = vmul.f32 %v1153, %v975
        %v1155 = vsub.f32 %v1150, %v1154
        %v1156 = vmul.f32 %v1155, %v1155
        %v1157 = vsel %vm295, %v1156, 0.0
        %1158 = vadd.xlane.f32.xlu0 %v1157
        %v1159 = vpop.xlane.xlu0 %1158
        %v1160 = vmul.f32 %v1159, %v975
        %v1161 = vadd.f32 %v1160, 1e-05
        %v1162 = vrsqrt.pop %v1161
        %v1163 = vmul.f32 %v1155, %v1162
        %v1164 = vlaneseq
        %v1165 = vshrl.u32 %v1164, 7
        %v1166 = vsub.s32 0, %v1165
        %v1167 = vrot.slane %v276, %v1166
        %v1168 = vmul.f32 %v1163, %v1167
        %v1169 = vlaneseq
        %v1170 = vshrl.u32 %v1169, 7
        %v1171 = vsub.s32 0, %v1170
        %v1172 = vrot.slane %v277, %v1171
        %v1173 = vadd.f32 %v1168, %v1172
        %v1174 = vld [vmem:[#allocation5 + $0x90] sm:$0xf]
        %v1175 = vld [vmem:[#allocation5 + $0x94] sm:$0xf]
        %v1176 = vld [vmem:[#allocation5 + $0x98] sm:$0xf]
        %v1177 = vld [vmem:[#allocation5 + $0x9c] sm:$0xf]
        %v1178 = vld [vmem:[#allocation5 + $0xa0] sm:$0xf]
        %v1179 = vld [vmem:[#allocation5 + $0xa4] sm:$0xf]
        %v1180 = vld [vmem:[#allocation5 + $0xa8] sm:$0xf]
        %v1181 = vld [vmem:[#allocation5 + $0xac] sm:$0xf]
        %v1182 = vld [vmem:[#allocation5 + $0xb0] sm:$0xf]
        %v1183 = vld [vmem:[#allocation5 + $0xb4] sm:$0xf]
        %v1184 = vld [vmem:[#allocation5 + $0xb8] sm:$0xf]
        %v1185 = vld [vmem:[#allocation5 + $0xbc] sm:$0xf]
        %v1186 = vld [vmem:[#allocation5 + $0xc0] sm:$0xf]
        %v1187 = vld [vmem:[#allocation5 + $0xc4] sm:$0xf]
        %v1188 = vld [vmem:[#allocation5 + $0xc8] sm:$0xf]
        %v1189 = vld [vmem:[#allocation5 + $0xcc] sm:$0xf]
        %v1190 = vld [vmem:[#allocation5 + $0xd0] sm:$0xf]
        %v1191 = vld [vmem:[#allocation5 + $0xd4] sm:$0xf]
        %v1192 = vld [vmem:[#allocation5 + $0xd8] sm:$0xf]
        %v1193 = vld [vmem:[#allocation5 + $0xdc] sm:$0xf]
        %v1194 = vld [vmem:[#allocation5 + $0xe0] sm:$0xf]
        %v1195 = vld [vmem:[#allocation5 + $0xe4] sm:$0xf]
        %v1196 = vld [vmem:[#allocation5 + $0xe8] sm:$0xf]
        %v1197 = vld [vmem:[#allocation5 + $0xec] sm:$0xf]
        %v1198 = vld [vmem:[#allocation5 + $0xf0] sm:$0xf]
        %v1199 = vld [vmem:[#allocation5 + $0xf4] sm:$0xf]
        %v1200 = vld [vmem:[#allocation5 + $0xf8] sm:$0xf]
        %v1201 = vld [vmem:[#allocation5 + $0xfc] sm:$0xf]
        %v1202 = vld [vmem:[#allocation5 + $0x100] sm:$0xf]
        %v1203 = vld [vmem:[#allocation5 + $0x104] sm:$0xf]
        %v1204 = vld [vmem:[#allocation5 + $0x108] sm:$0xf]
        %v1205 = vld [vmem:[#allocation5 + $0x10c] sm:$0xf]
        %v1206 = vld [vmem:[#allocation5 + $0x110] sm:$0xf]
        %v1207 = vld [vmem:[#allocation5 + $0x114] sm:$0xf]
        %v1208 = vld [vmem:[#allocation5 + $0x118] sm:$0xf]
        %v1209 = vld [vmem:[#allocation5 + $0x11c] sm:$0xf]
        %v1210 = vld [vmem:[#allocation7 + $0x18] sm:$0x1]
        %v1211 = vld [vmem:[#allocation7 + $0x19] sm:$0x1]
        %v1212 = vld [vmem:[#allocation7 + $0x1a] sm:$0x1]
        %v1213 = vld [vmem:[#allocation7 + $0x1b] sm:$0x1]
        %v1214 = vld [vmem:[#allocation7 + $0x1c] sm:$0x1]
        %v1215 = vld [vmem:[#allocation7 + $0x1d] sm:$0x1]
        %v1216 = vld [vmem:[#allocation7 + $0x1e] sm:$0x1]
        %v1217 = vld [vmem:[#allocation7 + $0x1f] sm:$0x1]
        %v1218 = vld [vmem:[#allocation7 + $0x20] sm:$0x1]
        %v1219 = vld [vmem:[#allocation7 + $0x21] sm:$0x1]
        %v1220 = vpack.c.bf16 %v1173, %v1173
        %v1221 = vlaneseq
        %v1222 = vshrl.u32 %v1221, 7
        %v1223 = vsub.s32 0, %v1222
        %v1224 = vrot.slane %v1210, %v1223
        %v1229 = vunpack.c.l.b16 %v1174
        %v1230 = vunpack.c.l.b16 %v1175
        %v1231 = vunpack.c.l.b16 %v1176
        %v1232 = vunpack.c.l.b16 %v1177
        %v1233 = vpack.c.b16 %v1230, %v1229
        %v1234 = vpack.c.b16 %v1232, %v1231
        %v1238 = vsel %vm295, %v1220, 0
        %1240 = vmatprep.subr.bf16.mxu0 0
        %1241 = vmatpush1.bf16.msra.mxu0 %v1233
        %1242 = vmatprep.subr.bf16.mxu0 0
        %1243 = vmatpush1.bf16.msra.mxu0 %v1234
        %1244 = vmatprep.subr.bf16.mxu0 0
        %1245 = vmatpush1.bf16.msra.mxu0 0
        %1246 = vmatprep.subr.bf16.mxu0 0
        %1247 = vmatpush1.bf16.msra.mxu0 0
        %1248 = vmatprep.subr.bf16.mxu0 0
        %1249 = vmatpush1.bf16.msra.mxu0 0
        %1250 = vmatprep.subr.bf16.mxu0 0
        %1251 = vmatpush1.bf16.msra.mxu0 0
        %1252 = vmatprep.subr.bf16.mxu0 0
        %1253 = vmatpush1.bf16.msra.mxu0 0
        %1254 = vmatprep.subr.bf16.mxu0 0
        %1255 = vmatpush1.bf16.msra.mxu0 0
        %1256 = vmatprep.subr.bf16.mxu0 0
        %1257 = vmatpush1.bf16.msra.mxu0 0
        %1258 = vmatprep.subr.bf16.mxu0 0
        %1259 = vmatpush1.bf16.msra.mxu0 0
        %1260 = vmatprep.subr.bf16.mxu0 0
        %1261 = vmatpush1.bf16.msra.mxu0 0
        %1262 = vmatprep.subr.bf16.mxu0 0
        %1263 = vmatpush1.bf16.msra.mxu0 0
        %1264 = vmatprep.subr.bf16.mxu0 0
        %1265 = vmatpush1.bf16.msra.mxu0 0
        %1266 = vmatprep.subr.bf16.mxu0 0
        %1267 = vmatpush1.bf16.msra.mxu0 0
        %1268 = vmatprep.subr.bf16.mxu0 0
        %1269 = vmatpush1.bf16.msra.mxu0 0
        %1270 = vmatprep.subr.bf16.mxu0 0
        %1271 = vmatpush1.bf16.msra.mxu0 0
        %1272 = vmatprep.mubr.bf16.mxu0 0
        %1273 = vmatmul.mubr.bf16.gmra.mrb[0].mxu0 %v1238
        %v1274 = vpop.f32.mrb[0].mxu0
        %v1275 = vadd.f32 %v1224, %v1274
        %v1276 = vpop.f32.mrb[0].mxu0
        %v1277 = vpop.f32.mrb[0].mxu0
        %v1278 = vpop.f32.mrb[0].mxu0
        %1279 = vdwg.mxu0
        %v1280 = vlaneseq
        %v1281 = vshrl.u32 %v1280, 7
        %v1282 = vsub.s32 0, %v1281
        %v1283 = vrot.slane %v1211, %v1282
        %v1288 = vunpack.c.l.b16 %v1178
        %v1289 = vunpack.c.l.b16 %v1179
        %v1290 = vunpack.c.l.b16 %v1180
        %v1291 = vunpack.c.l.b16 %v1181
        %v1292 = vpack.c.b16 %v1289, %v1288
        %v1293 = vpack.c.b16 %v1291, %v1290
        %1296 = vmatprep.subr.bf16.mxu0 0
        %1297 = vmatpush1.bf16.msra.mxu0 %v1292
        %1298 = vmatprep.subr.bf16.mxu0 0
        %1299 = vmatpush1.bf16.msra.mxu0 %v1293
        %1300 = vmatprep.subr.bf16.mxu0 0
        %1301 = vmatpush1.bf16.msra.mxu0 0
        %1302 = vmatprep.subr.bf16.mxu0 0
        %1303 = vmatpush1.bf16.msra.mxu0 0
        %1304 = vmatprep.subr.bf16.mxu0 0
        %1305 = vmatpush1.bf16.msra.mxu0 0
        %1306 = vmatprep.subr.bf16.mxu0 0
        %1307 = vmatpush1.bf16.msra.mxu0 0
        %1308 = vmatprep.subr.bf16.mxu0 0
        %1309 = vmatpush1.bf16.msra.mxu0 0
        %1310 = vmatprep.subr.bf16.mxu0 0
        %1311 = vmatpush1.bf16.msra.mxu0 0
        %1312 = vmatprep.subr.bf16.mxu0 0
        %1313 = vmatpush1.bf16.msra.mxu0 0
        %1314 = vmatprep.subr.bf16.mxu0 0
        %1315 = vmatpush1.bf16.msra.mxu0 0
        %1316 = vmatprep.subr.bf16.mxu0 0
        %1317 = vmatpush1.bf16.msra.mxu0 0
        %1318 = vmatprep.subr.bf16.mxu0 0
        %1319 = vmatpush1.bf16.msra.mxu0 0
        %1320 = vmatprep.subr.bf16.mxu0 0
        %1321 = vmatpush1.bf16.msra.mxu0 0
        %1322 = vmatprep.subr.bf16.mxu0 0
        %1323 = vmatpush1.bf16.msra.mxu0 0
        %1324 = vmatprep.subr.bf16.mxu0 0
        %1325 = vmatpush1.bf16.msra.mxu0 0
        %1326 = vmatprep.subr.bf16.mxu0 0
        %1327 = vmatpush1.bf16.msra.mxu0 0
        %1328 = vmatprep.mubr.bf16.mxu0 0
        %1329 = vmatmul.mubr.bf16.gmra.mrb[0].mxu0 %v1238
        %v1330 = vpop.f32.mrb[0].mxu0
        %v1331 = vadd.f32 %v1283, %v1330
        %v1332 = vpop.f32.mrb[0].mxu0
        %v1333 = vpop.f32.mrb[0].mxu0
        %v1334 = vpop.f32.mrb[0].mxu0
        %1335 = vdwg.mxu0
        %v1336 = vlaneseq
        %v1337 = vshrl.u32 %v1336, 7
        %v1338 = vsub.s32 0, %v1337
        %v1339 = vrot.slane %v1212, %v1338
        %v1344 = vunpack.c.l.b16 %v1182
        %v1345 = vunpack.c.l.b16 %v1183
        %v1346 = vunpack.c.l.b16 %v1184
        %v1347 = vunpack.c.l.b16 %v1185
        %v1348 = vpack.c.b16 %v1345, %v1344
        %v1349 = vpack.c.b16 %v1347, %v1346
        %1352 = vmatprep.subr.bf16.mxu0 0
        %1353 = vmatpush1.bf16.msra.mxu0 %v1348
        %1354 = vmatprep.subr.bf16.mxu0 0
        %1355 = vmatpush1.bf16.msra.mxu0 %v1349
        %1356 = vmatprep.subr.bf16.mxu0 0
        %1357 = vmatpush1.bf16.msra.mxu0 0
        %1358 = vmatprep.subr.bf16.mxu0 0
        %1359 = vmatpush1.bf16.msra.mxu0 0
        %1360 = vmatprep.subr.bf16.mxu0 0
        %1361 = vmatpush1.bf16.msra.mxu0 0
        %1362 = vmatprep.subr.bf16.mxu0 0
        %1363 = vmatpush1.bf16.msra.mxu0 0
        %1364 = vmatprep.subr.bf16.mxu0 0
        %1365 = vmatpush1.bf16.msra.mxu0 0
        %1366 = vmatprep.subr.bf16.mxu0 0
        %1367 = vmatpush1.bf16.msra.mxu0 0
        %1368 = vmatprep.subr.bf16.mxu0 0
        %1369 = vmatpush1.bf16.msra.mxu0 0
        %1370 = vmatprep.subr.bf16.mxu0 0
        %1371 = vmatpush1.bf16.msra.mxu0 0
        %1372 = vmatprep.subr.bf16.mxu0 0
        %1373 = vmatpush1.bf16.msra.mxu0 0
        %1374 = vmatprep.subr.bf16.mxu0 0
        %1375 = vmatpush1.bf16.msra.mxu0 0
        %1376 = vmatprep.subr.bf16.mxu0 0
        %1377 = vmatpush1.bf16.msra.mxu0 0
        %1378 = vmatprep.subr.bf16.mxu0 0
        %1379 = vmatpush1.bf16.msra.mxu0 0
        %1380 = vmatprep.subr.bf16.mxu0 0
        %1381 = vmatpush1.bf16.msra.mxu0 0
        %1382 = vmatprep.subr.bf16.mxu0 0
        %1383 = vmatpush1.bf16.msra.mxu0 0
        %1384 = vmatprep.mubr.bf16.mxu0 0
        %1385 = vmatmul.mubr.bf16.gmra.mrb[0].mxu0 %v1238
        %v1386 = vpop.f32.mrb[0].mxu0
        %v1387 = vadd.f32 %v1339, %v1386
        %v1388 = vpop.f32.mrb[0].mxu0
        %v1389 = vpop.f32.mrb[0].mxu0
        %v1390 = vpop.f32.mrb[0].mxu0
        %1391 = vdwg.mxu0
        %v1393 = vcombine.high %v1275, %v1275
        %v1395 = vunpack.c.l.s4 1966171168
        %v1396 = vunpack.c.0.s8 %v1395
        %v1397 = vlaneseq
        %v1398 = vshrl.u32 %v1397, 7
        %v1399 = vsub.s32 %v1396, %v1398
        %v1400 = vrot.slane %v1275, %v1399
        %v1402 = vunpack.c.l.s4 1966171168
        %v1403 = vunpack.c.0.s8 %v1402
        %v1404 = vlaneseq
        %v1405 = vshrl.u32 %v1404, 7
        %v1406 = vsub.s32 %v1403, %v1405
        %v1407 = vrot.slane %v1393, %v1406
        %v1408 = vcombine.high %v1400, %v1400
        %v1409 = vcombine.high %v1407, %v1407
        %v1411 = vunpack.c.l.s4 1966171168
        %v1412 = vunpack.c.0.s8 %v1411
        %v1413 = vlaneseq
        %v1414 = vshrl.u32 %v1413, 7
        %v1415 = vsub.s32 %v1412, %v1414
        %v1416 = vrot.slane %v1400, %v1415
        %v1418 = vunpack.c.l.s4 1966171168
        %v1419 = vunpack.c.0.s8 %v1418
        %v1420 = vlaneseq
        %v1421 = vshrl.u32 %v1420, 7
        %v1422 = vsub.s32 %v1419, %v1421
        %v1423 = vrot.slane %v1407, %v1422
        %v1425 = vunpack.c.l.s4 1966171168
        %v1426 = vunpack.c.0.s8 %v1425
        %v1427 = vlaneseq
        %v1428 = vshrl.u32 %v1427, 7
        %v1429 = vsub.s32 %v1426, %v1428
        %v1430 = vrot.slane %v1408, %v1429
        %v1432 = vunpack.c.l.s4 1966171168
        %v1433 = vunpack.c.0.s8 %v1432
        %v1434 = vlaneseq
        %v1435 = vshrl.u32 %v1434, 7
        %v1436 = vsub.s32 %v1433, %v1435
        %v1437 = vrot.slane %v1409, %v1436
        %v1438 = vcombine.high %v1416, %v1416
        %v1439 = vcombine.high %v1423, %v1423
        %v1440 = vcombine.high %v1430, %v1430
        %v1441 = vcombine.high %v1437, %v1437
        %v1442 = vlaneseq
        %v1443 = vshrl.u32 %v1442, 7
        %v1444 = vsub.s32 0, %v1443
        %v1445 = vrot.slane %v1416, %v1444
        %v1446 = vlaneseq
        %v1447 = vshrl.u32 %v1446, 7
        %v1448 = vsub.s32 0, %v1447
        %v1449 = vrot.slane %v1430, %v1448
        %v1450 = vlaneseq
        %v1451 = vshrl.u32 %v1450, 7
        %v1452 = vsub.s32 0, %v1451
        %v1453 = vrot.slane %v1438, %v1452
        %v1454 = vlaneseq
        %v1455 = vshrl.u32 %v1454, 7
        %v1456 = vsub.s32 0, %v1455
        %v1457 = vrot.slane %v1440, %v1456
        %v1458 = vlaneseq
        %v1459 = vshrl.u32 %v1458, 7
        %v1460 = vsub.s32 0, %v1459
        %v1461 = vrot.slane %v1423, %v1460
        %v1462 = vlaneseq
        %v1463 = vshrl.u32 %v1462, 7
        %v1464 = vsub.s32 0, %v1463
        %v1465 = vrot.slane %v1437, %v1464
        %v1466 = vlaneseq
        %v1467 = vshrl.u32 %v1466, 7
        %v1468 = vsub.s32 0, %v1467
        %v1469 = vrot.slane %v1439, %v1468
        %v1470 = vlaneseq
        %v1471 = vshrl.u32 %v1470, 7
        %v1472 = vsub.s32 0, %v1471
        %v1473 = vrot.slane %v1441, %v1472
        %v1482 = vmul.f32 %v1445, %v228
        %v1483 = vmul.f32 %v1449, %v228
        %v1484 = vmul.f32 %v1453, %v228
        %v1485 = vmul.f32 %v1457, %v228
        %v1486 = vmul.f32 %v1461, %v228
        %v1487 = vmul.f32 %v1465, %v228
        %v1488 = vmul.f32 %v1469, %v228
        %v1489 = vmul.f32 %v1473, %v228
        %v1490 = vpack.c.bf16 %v1483, %v1482
        %v1491 = vpack.c.bf16 %v1485, %v1484
        %v1492 = vpack.c.bf16 %v1487, %v1486
        %v1493 = vpack.c.bf16 %v1489, %v1488
        %v1494 = vpack.c.bf16 %v1331, %v1331
        %v1496 = vsel %vm295, %v1490, 0
        %v1499 = vsel %vm295, %v1491, 0
        %v1502 = vsel %vm295, %v1492, 0
        %v1505 = vsel %vm295, %v1493, 0
        %v1508 = vsel %vm295, %v1494, 0
        %1510 = vmatprep.subr.bf16.mxu0 0
        %1511 = vmatpush1.bf16.xpose.msra.mxu0 %v1508
        %1512 = vmatprep.subr.bf16.mxu0 0
        %1513 = vmatpush1.bf16.xpose.msra.mxu0 0
        %1514 = vmatprep.subr.bf16.mxu0 0
        %1515 = vmatpush1.bf16.xpose.msra.mxu0 0
        %1516 = vmatprep.subr.bf16.mxu0 0
        %1517 = vmatpush1.bf16.xpose.msra.mxu0 0
        %1518 = vmatprep.subr.bf16.mxu0 0
        %1519 = vmatpush1.bf16.xpose.msra.mxu0 0
        %1520 = vmatprep.subr.bf16.mxu0 0
        %1521 = vmatpush1.bf16.xpose.msra.mxu0 0
        %1522 = vmatprep.subr.bf16.mxu0 0
        %1523 = vmatpush1.bf16.xpose.msra.mxu0 0
        %1524 = vmatprep.subr.bf16.mxu0 0
        %1525 = vmatpush1.bf16.xpose.msra.mxu0 0
        %1526 = vmatprep.subr.bf16.mxu0 0
        %1527 = vmatpush1.bf16.xpose.msra.mxu0 0
        %1528 = vmatprep.subr.bf16.mxu0 0
        %1529 = vmatpush1.bf16.xpose.msra.mxu0 0
        %1530 = vmatprep.subr.bf16.mxu0 0
        %1531 = vmatpush1.bf16.xpose.msra.mxu0 0
        %1532 = vmatprep.subr.bf16.mxu0 0
        %1533 = vmatpush1.bf16.xpose.msra.mxu0 0
        %1534 = vmatprep.subr.bf16.mxu0 0
        %1535 = vmatpush1.bf16.xpose.msra.mxu0 0
        %1536 = vmatprep.subr.bf16.mxu0 0
        %1537 = vmatpush1.bf16.xpose.msra.mxu0 0
        %1538 = vmatprep.subr.bf16.mxu0 0
        %1539 = vmatpush1.bf16.xpose.msra.mxu0 0
        %1540 = vmatprep.subr.bf16.mxu0 0
        %1541 = vmatpush1.bf16.xpose.msra.mxu0 0
        %1542 = vmatprep.mubr.bf16.mxu0 0
        %1543 = vmatmul.mubr.bf16.gmra.mrb[0].mxu0 %v1496
        %v1544 = vpop.f32.mrb[0].mxu0
        %v1545 = vadd.f32 0.0, %v1544
        %v1546 = vpop.f32.mrb[0].mxu0
        %v1547 = vpop.f32.mrb[0].mxu0
        %v1548 = vadd.f32 0.0, %v1547
        %v1549 = vpop.f32.mrb[0].mxu0
        %1550 = vmatprep.mubr.bf16.mxu0 0
        %1551 = vmatmul.mubr.bf16.gmra.mrb[0].mxu0 %v1499
        %v1552 = vpop.f32.mrb[0].mxu0
        %v1553 = vadd.f32 0.0, %v1552
        %v1554 = vpop.f32.mrb[0].mxu0
        %v1555 = vpop.f32.mrb[0].mxu0
        %v1556 = vadd.f32 0.0, %v1555
        %v1557 = vpop.f32.mrb[0].mxu0
        %1558 = vmatprep.mubr.bf16.mxu0 0
        %1559 = vmatmul.mubr.bf16.gmra.mrb[0].mxu0 %v1502
        %v1560 = vpop.f32.mrb[0].mxu0
        %v1561 = vadd.f32 0.0, %v1560
        %v1562 = vpop.f32.mrb[0].mxu0
        %v1563 = vpop.f32.mrb[0].mxu0
        %v1564 = vadd.f32 0.0, %v1563
        %v1565 = vpop.f32.mrb[0].mxu0
        %1566 = vmatprep.mubr.bf16.mxu0 0
        %1567 = vmatmul.mubr.bf16.gmra.mrb[0].mxu0 %v1505
        %v1568 = vpop.f32.mrb[0].mxu0
        %v1569 = vadd.f32 0.0, %v1568
        %v1570 = vpop.f32.mrb[0].mxu0
        %v1571 = vpop.f32.mrb[0].mxu0
        %v1572 = vadd.f32 0.0, %v1571
        %v1573 = vpop.f32.mrb[0].mxu0
        %1574 = vdwg.mxu0
        %v1575 = vsel %vm634, %v1545, -inf
        %1576 = vmax.xlane.f32.xlu0 %v1575
        %v1577 = vpop.xlane.xlu0 %1576
        %v1578 = vsel %vm634, %v1548, -inf
        %1579 = vmax.xlane.f32.xlu0 %v1578
        %v1580 = vpop.xlane.xlu0 %1579
        %v1581 = vsel %vm634, %v1553, -inf
        %1582 = vmax.xlane.f32.xlu0 %v1581
        %v1583 = vpop.xlane.xlu0 %1582
        %v1584 = vsel %vm634, %v1556, -inf
        %1585 = vmax.xlane.f32.xlu0 %v1584
        %v1586 = vpop.xlane.xlu0 %1585
        %v1587 = vsel %vm634, %v1561, -inf
        %1588 = vmax.xlane.f32.xlu0 %v1587
        %v1589 = vpop.xlane.xlu0 %1588
        %v1590 = vsel %vm634, %v1564, -inf
        %1591 = vmax.xlane.f32.xlu0 %v1590
        %v1592 = vpop.xlane.xlu0 %1591
        %v1593 = vsel %vm634, %v1569, -inf
        %1594 = vmax.xlane.f32.xlu0 %v1593
        %v1595 = vpop.xlane.xlu0 %1594
        %v1596 = vsel %vm634, %v1572, -inf
        %1597 = vmax.xlane.f32.xlu0 %v1596
        %v1598 = vpop.xlane.xlu0 %1597
        %v1599 = vsub.f32 %v1545, %v1577
        %v1600 = vsub.f32 %v1548, %v1580
        %v1601 = vsub.f32 %v1553, %v1583
        %v1602 = vsub.f32 %v1556, %v1586
        %v1603 = vsub.f32 %v1561, %v1589
        %v1604 = vsub.f32 %v1564, %v1592
        %v1605 = vsub.f32 %v1569, %v1595
        %v1606 = vsub.f32 %v1572, %v1598
        %v1607 = vmul.f32 %v1599, 1.442695
        %v1608 = vpow.pop %v1607
        %v1609 = vmul.f32 %v1600, 1.442695
        %v1610 = vpow.pop %v1609
        %v1611 = vmul.f32 %v1601, 1.442695
        %v1612 = vpow.pop %v1611
        %v1613 = vmul.f32 %v1602, 1.442695
        %v1614 = vpow.pop %v1613
        %v1615 = vmul.f32 %v1603, 1.442695
        %v1616 = vpow.pop %v1615
        %v1617 = vmul.f32 %v1604, 1.442695
        %v1618 = vpow.pop %v1617
        %v1619 = vmul.f32 %v1605, 1.442695
        %v1620 = vpow.pop %v1619
        %v1621 = vmul.f32 %v1606, 1.442695
        %v1622 = vpow.pop %v1621
        %v1623 = vsel %vm634, %v1608, 0.0
        %1624 = vadd.xlane.f32.xlu0 %v1623
        %v1625 = vpop.xlane.xlu0 %1624
        %v1626 = vsel %vm634, %v1610, 0.0
        %1627 = vadd.xlane.f32.xlu0 %v1626
        %v1628 = vpop.xlane.xlu0 %1627
        %v1629 = vsel %vm634, %v1612, 0.0
        %1630 = vadd.xlane.f32.xlu0 %v1629
        %v1631 = vpop.xlane.xlu0 %1630
        %v1632 = vsel %vm634, %v1614, 0.0
        %1633 = vadd.xlane.f32.xlu0 %v1632
        %v1634 = vpop.xlane.xlu0 %1633
        %v1635 = vsel %vm634, %v1616, 0.0
        %1636 = vadd.xlane.f32.xlu0 %v1635
        %v1637 = vpop.xlane.xlu0 %1636
        %v1638 = vsel %vm634, %v1618, 0.0
        %1639 = vadd.xlane.f32.xlu0 %v1638
        %v1640 = vpop.xlane.xlu0 %1639
        %v1641 = vsel %vm634, %v1620, 0.0
        %1642 = vadd.xlane.f32.xlu0 %v1641
        %v1643 = vpop.xlane.xlu0 %1642
        %v1644 = vsel %vm634, %v1622, 0.0
        %1645 = vadd.xlane.f32.xlu0 %v1644
        %v1646 = vpop.xlane.xlu0 %1645
        %v1647 = vrcp.pop %v1625
        %v1648 = vmul.f32 %v1608, %v1647
        %v1649 = vrcp.pop %v1628
        %v1650 = vmul.f32 %v1610, %v1649
        %v1651 = vrcp.pop %v1631
        %v1652 = vmul.f32 %v1612, %v1651
        %v1653 = vrcp.pop %v1634
        %v1654 = vmul.f32 %v1614, %v1653
        %v1655 = vrcp.pop %v1637
        %v1656 = vmul.f32 %v1616, %v1655
        %v1657 = vrcp.pop %v1640
        %v1658 = vmul.f32 %v1618, %v1657
        %v1659 = vrcp.pop %v1643
        %v1660 = vmul.f32 %v1620, %v1659
        %v1661 = vrcp.pop %v1646
        %v1662 = vmul.f32 %v1622, %v1661
        %v1663 = vpack.c.bf16 %v1650, %v1648
        %v1664 = vpack.c.bf16 %v1654, %v1652
        %v1665 = vpack.c.bf16 %v1658, %v1656
        %v1666 = vpack.c.bf16 %v1662, %v1660
        %v1667 = vpack.c.bf16 %v1387, %v1387
        %v1669 = vsel %vm634, %v1663, 0
        %v1672 = vsel %vm634, %v1664, 0
        %v1675 = vsel %vm634, %v1665, 0
        %v1678 = vsel %vm634, %v1666, 0
        %v1681 = vsel %vm740, %v1667, 0
        %1683 = vmatprep.subr.bf16.mxu0 0
        %1684 = vmatpush1.bf16.msra.mxu0 %v1681
        %1685 = vmatprep.subr.bf16.mxu0 0
        %1686 = vmatpush1.bf16.msra.mxu0 0
        %1687 = vmatprep.subr.bf16.mxu0 0
        %1688 = vmatpush1.bf16.msra.mxu0 0
        %1689 = vmatprep.subr.bf16.mxu0 0
        %1690 = vmatpush1.bf16.msra.mxu0 0
        %1691 = vmatprep.subr.bf16.mxu0 0
        %1692 = vmatpush1.bf16.msra.mxu0 0
        %1693 = vmatprep.subr.bf16.mxu0 0
        %1694 = vmatpush1.bf16.msra.mxu0 0
        %1695 = vmatprep.subr.bf16.mxu0 0
        %1696 = vmatpush1.bf16.msra.mxu0 0
        %1697 = vmatprep.subr.bf16.mxu0 0
        %1698 = vmatpush1.bf16.msra.mxu0 0
        %1699 = vmatprep.subr.bf16.mxu0 0
        %1700 = vmatpush1.bf16.msra.mxu0 0
        %1701 = vmatprep.subr.bf16.mxu0 0
        %1702 = vmatpush1.bf16.msra.mxu0 0
        %1703 = vmatprep.subr.bf16.mxu0 0
        %1704 = vmatpush1.bf16.msra.mxu0 0
        %1705 = vmatprep.subr.bf16.mxu0 0
        %1706 = vmatpush1.bf16.msra.mxu0 0
        %1707 = vmatprep.subr.bf16.mxu0 0
        %1708 = vmatpush1.bf16.msra.mxu0 0
        %1709 = vmatprep.subr.bf16.mxu0 0
        %1710 = vmatpush1.bf16.msra.mxu0 0
        %1711 = vmatprep.subr.bf16.mxu0 0
        %1712 = vmatpush1.bf16.msra.mxu0 0
        %1713 = vmatprep.subr.bf16.mxu0 0
        %1714 = vmatpush1.bf16.msra.mxu0 0
        %1715 = vmatprep.mubr.bf16.mxu0 0
        %1716 = vmatmul.mubr.bf16.gmra.mrb[0].mxu0 %v1669
        %v1717 = vpop.f32.mrb[0].mxu0
        %v1718 = vadd.f32 0.0, %v1717
        %v1719 = vpop.f32.mrb[0].mxu0
        %v1720 = vpop.f32.mrb[0].mxu0
        %v1721 = vadd.f32 0.0, %v1720
        %v1722 = vpop.f32.mrb[0].mxu0
        %1723 = vmatprep.mubr.bf16.mxu0 0
        %1724 = vmatmul.mubr.bf16.gmra.mrb[0].mxu0 %v1672
        %v1725 = vpop.f32.mrb[0].mxu0
        %v1726 = vadd.f32 0.0, %v1725
        %v1727 = vpop.f32.mrb[0].mxu0
        %v1728 = vpop.f32.mrb[0].mxu0
        %v1729 = vadd.f32 0.0, %v1728
        %v1730 = vpop.f32.mrb[0].mxu0
        %1731 = vmatprep.mubr.bf16.mxu0 0
        %1732 = vmatmul.mubr.bf16.gmra.mrb[0].mxu0 %v1675
        %v1733 = vpop.f32.mrb[0].mxu0
        %v1734 = vadd.f32 0.0, %v1733
        %v1735 = vpop.f32.mrb[0].mxu0
        %v1736 = vpop.f32.mrb[0].mxu0
        %v1737 = vadd.f32 0.0, %v1736
        %v1738 = vpop.f32.mrb[0].mxu0
        %1739 = vmatprep.mubr.bf16.mxu0 0
        %1740 = vmatmul.mubr.bf16.gmra.mrb[0].mxu0 %v1678
        %v1741 = vpop.f32.mrb[0].mxu0
        %v1742 = vadd.f32 0.0, %v1741
        %v1743 = vpop.f32.mrb[0].mxu0
        %v1744 = vpop.f32.mrb[0].mxu0
        %v1745 = vadd.f32 0.0, %v1744
        %v1746 = vpop.f32.mrb[0].mxu0
        %1747 = vdwg.mxu0
        %v1748 = vmul.f32 %v1718, %v227
        %v1749 = vmul.f32 %v1721, %v227
        %v1750 = vmul.f32 %v1726, %v227
        %v1751 = vmul.f32 %v1729, %v227
        %v1752 = vmul.f32 %v1734, %v227
        %v1753 = vmul.f32 %v1737, %v227
        %v1754 = vmul.f32 %v1742, %v227
        %v1755 = vmul.f32 %v1745, %v227
        %v1756 = vsel %vm295, %v1748, 0.0
        %v1757 = vrot.slane %v1756, 4
        %v1758 = vadd.f32 %v1756, %v1757
        %v1759 = vrot.slane %v1758, 2
        %v1760 = vadd.f32 %v1758, %v1759
        %v1761 = vrot.slane %v1760, 1
        %v1762 = vadd.f32 %v1760, %v1761
        %v1763 = vsel %vm295, %v1749, 0.0
        %v1764 = vrot.slane %v1763, 4
        %v1765 = vadd.f32 %v1763, %v1764
        %v1766 = vrot.slane %v1765, 2
        %v1767 = vadd.f32 %v1765, %v1766
        %v1768 = vrot.slane %v1767, 1
        %v1769 = vadd.f32 %v1767, %v1768
        %v1770 = vsel %vm295, %v1750, 0.0
        %v1771 = vrot.slane %v1770, 4
        %v1772 = vadd.f32 %v1770, %v1771
        %v1773 = vrot.slane %v1772, 2
        %v1774 = vadd.f32 %v1772, %v1773
        %v1775 = vrot.slane %v1774, 1
        %v1776 = vadd.f32 %v1774, %v1775
        %v1777 = vsel %vm295, %v1751, 0.0
        %v1778 = vrot.slane %v1777, 4
        %v1779 = vadd.f32 %v1777, %v1778
        %v1780 = vrot.slane %v1779, 2
        %v1781 = vadd.f32 %v1779, %v1780
        %v1782 = vrot.slane %v1781, 1
        %v1783 = vadd.f32 %v1781, %v1782
        %v1784 = vsel %vm295, %v1752, 0.0
        %v1785 = vrot.slane %v1784, 4
        %v1786 = vadd.f32 %v1784, %v1785
        %v1787 = vrot.slane %v1786, 2
        %v1788 = vadd.f32 %v1786, %v1787
        %v1789 = vrot.slane %v1788, 1
        %v1790 = vadd.f32 %v1788, %v1789
        %v1791 = vsel %vm295, %v1753, 0.0
        %v1792 = vrot.slane %v1791, 4
        %v1793 = vadd.f32 %v1791, %v1792
        %v1794 = vrot.slane %v1793, 2
        %v1795 = vadd.f32 %v1793, %v1794
        %v1796 = vrot.slane %v1795, 1
        %v1797 = vadd.f32 %v1795, %v1796
        %v1798 = vsel %vm295, %v1754, 0.0
        %v1799 = vrot.slane %v1798, 4
        %v1800 = vadd.f32 %v1798, %v1799
        %v1801 = vrot.slane %v1800, 2
        %v1802 = vadd.f32 %v1800, %v1801
        %v1803 = vrot.slane %v1802, 1
        %v1804 = vadd.f32 %v1802, %v1803
        %v1805 = vsel %vm295, %v1755, 0.0
        %v1806 = vrot.slane %v1805, 4
        %v1807 = vadd.f32 %v1805, %v1806
        %v1808 = vrot.slane %v1807, 2
        %v1809 = vadd.f32 %v1807, %v1808
        %v1810 = vrot.slane %v1809, 1
        %v1811 = vadd.f32 %v1809, %v1810
        %v1812 = vpack.c.bf16 %v1762, %v1762
        %v1813 = vpack.c.bf16 %v1769, %v1769
        %v1814 = vpack.c.bf16 %v1776, %v1776
        %v1815 = vpack.c.bf16 %v1783, %v1783
        %v1816 = vpack.c.bf16 %v1790, %v1790
        %v1817 = vpack.c.bf16 %v1797, %v1797
        %v1818 = vpack.c.bf16 %v1804, %v1804
        %v1819 = vpack.c.bf16 %v1811, %v1811
        %v1820 = vlaneseq
        %v1821 = vshrl.u32 %v1820, 7
        %v1822 = vsub.s32 0, %v1821
        %v1823 = vrot.slane %v1213, %v1822
        %v1832 = vunpack.c.l.b16 %v1812
        %v1833 = vunpack.c.l.b16 %v1813
        %v1834 = vunpack.c.l.b16 %v1814
        %v1835 = vunpack.c.l.b16 %v1815
        %v1836 = vunpack.c.l.b16 %v1816
        %v1837 = vunpack.c.l.b16 %v1817
        %v1838 = vunpack.c.l.b16 %v1818
        %v1839 = vunpack.c.l.b16 %v1819
        %v1840 = vsel %vm901, %v1833, %v1832
        %v1841 = vsel %vm903, %v1834, %v1840
        %v1842 = vsel %vm905, %v1835, %v1841
        %v1843 = vsel %vm907, %v1836, %v1842
        %v1844 = vsel %vm909, %v1837, %v1843
        %v1845 = vsel %vm911, %v1838, %v1844
        %v1846 = vsel %vm913, %v1839, %v1845
        %v1847 = vpack.c.b16 %v1846, %v1846
        %v1852 = vunpack.c.l.b16 %v1186
        %v1853 = vunpack.c.l.b16 %v1187
        %v1854 = vunpack.c.l.b16 %v1188
        %v1855 = vunpack.c.l.b16 %v1189
        %v1856 = vpack.c.b16 %v1853, %v1852
        %v1857 = vpack.c.b16 %v1855, %v1854
        %v1861 = vsel %vm295, %v1847, 0
        %1863 = vmatprep.subr.bf16.mxu0 0
        %1864 = vmatpush1.bf16.msra.mxu0 %v1856
        %1865 = vmatprep.subr.bf16.mxu0 0
        %1866 = vmatpush1.bf16.msra.mxu0 %v1857
        %1867 = vmatprep.subr.bf16.mxu0 0
        %1868 = vmatpush1.bf16.msra.mxu0 0
        %1869 = vmatprep.subr.bf16.mxu0 0
        %1870 = vmatpush1.bf16.msra.mxu0 0
        %1871 = vmatprep.subr.bf16.mxu0 0
        %1872 = vmatpush1.bf16.msra.mxu0 0
        %1873 = vmatprep.subr.bf16.mxu0 0
        %1874 = vmatpush1.bf16.msra.mxu0 0
        %1875 = vmatprep.subr.bf16.mxu0 0
        %1876 = vmatpush1.bf16.msra.mxu0 0
        %1877 = vmatprep.subr.bf16.mxu0 0
        %1878 = vmatpush1.bf16.msra.mxu0 0
        %1879 = vmatprep.subr.bf16.mxu0 0
        %1880 = vmatpush1.bf16.msra.mxu0 0
        %1881 = vmatprep.subr.bf16.mxu0 0
        %1882 = vmatpush1.bf16.msra.mxu0 0
        %1883 = vmatprep.subr.bf16.mxu0 0
        %1884 = vmatpush1.bf16.msra.mxu0 0
        %1885 = vmatprep.subr.bf16.mxu0 0
        %1886 = vmatpush1.bf16.msra.mxu0 0
        %1887 = vmatprep.subr.bf16.mxu0 0
        %1888 = vmatpush1.bf16.msra.mxu0 0
        %1889 = vmatprep.subr.bf16.mxu0 0
        %1890 = vmatpush1.bf16.msra.mxu0 0
        %1891 = vmatprep.subr.bf16.mxu0 0
        %1892 = vmatpush1.bf16.msra.mxu0 0
        %1893 = vmatprep.subr.bf16.mxu0 0
        %1894 = vmatpush1.bf16.msra.mxu0 0
        %1895 = vmatprep.mubr.bf16.mxu0 0
        %1896 = vmatmul.mubr.bf16.gmra.mrb[0].mxu0 %v1861
        %v1897 = vpop.f32.mrb[0].mxu0
        %v1898 = vadd.f32 %v1823, %v1897
        %v1899 = vpop.f32.mrb[0].mxu0
        %v1900 = vpop.f32.mrb[0].mxu0
        %v1901 = vpop.f32.mrb[0].mxu0
        %1902 = vdwg.mxu0
        %v1903 = vadd.f32 %v1173, %v1898
        %v1904 = vsel %vm295, %v1903, 0.0
        %1905 = vadd.xlane.f32.xlu0 %v1904
        %v1906 = vpop.xlane.xlu0 %1905
        %v1907 = vmul.f32 %v1906, %v975
        %v1908 = vsub.f32 %v1903, %v1907
        %v1909 = vmul.f32 %v1908, %v1908
        %v1910 = vsel %vm295, %v1909, 0.0
        %1911 = vadd.xlane.f32.xlu0 %v1910
        %v1912 = vpop.xlane.xlu0 %1911
        %v1913 = vmul.f32 %v1912, %v975
        %v1914 = vadd.f32 %v1913, 1e-05
        %v1915 = vrsqrt.pop %v1914
        %v1916 = vmul.f32 %v1908, %v1915
        %v1917 = vlaneseq
        %v1918 = vshrl.u32 %v1917, 7
        %v1919 = vsub.s32 0, %v1918
        %v1920 = vrot.slane %v1214, %v1919
        %v1921 = vmul.f32 %v1916, %v1920
        %v1922 = vlaneseq
        %v1923 = vshrl.u32 %v1922, 7
        %v1924 = vsub.s32 0, %v1923
        %v1925 = vrot.slane %v1215, %v1924
        %v1926 = vadd.f32 %v1921, %v1925
        %v1927 = vpack.c.bf16 %v1926, %v1926
        %v1928 = vlaneseq
        %v1929 = vshrl.u32 %v1928, 7
        %v1930 = vsub.s32 0, %v1929
        %v1931 = vrot.slane %v1216, %v1930
        %v1936 = vunpack.c.l.b16 %v1190
        %v1937 = vunpack.c.l.b16 %v1191
        %v1938 = vunpack.c.l.b16 %v1192
        %v1939 = vunpack.c.l.b16 %v1193
        %v1940 = vpack.c.b16 %v1937, %v1936
        %v1941 = vpack.c.b16 %v1939, %v1938
        %v1945 = vsel %vm295, %v1927, 0
        %1947 = vmatprep.subr.bf16.mxu0 0
        %1948 = vmatpush1.bf16.msra.mxu0 %v1940
        %1949 = vmatprep.subr.bf16.mxu0 0
        %1950 = vmatpush1.bf16.msra.mxu0 %v1941
        %1951 = vmatprep.subr.bf16.mxu0 0
        %1952 = vmatpush1.bf16.msra.mxu0 0
        %1953 = vmatprep.subr.bf16.mxu0 0
        %1954 = vmatpush1.bf16.msra.mxu0 0
        %1955 = vmatprep.subr.bf16.mxu0 0
        %1956 = vmatpush1.bf16.msra.mxu0 0
        %1957 = vmatprep.subr.bf16.mxu0 0
        %1958 = vmatpush1.bf16.msra.mxu0 0
        %1959 = vmatprep.subr.bf16.mxu0 0
        %1960 = vmatpush1.bf16.msra.mxu0 0
        %1961 = vmatprep.subr.bf16.mxu0 0
        %1962 = vmatpush1.bf16.msra.mxu0 0
        %1963 = vmatprep.subr.bf16.mxu0 0
        %1964 = vmatpush1.bf16.msra.mxu0 0
        %1965 = vmatprep.subr.bf16.mxu0 0
        %1966 = vmatpush1.bf16.msra.mxu0 0
        %1967 = vmatprep.subr.bf16.mxu0 0
        %1968 = vmatpush1.bf16.msra.mxu0 0
        %1969 = vmatprep.subr.bf16.mxu0 0
        %1970 = vmatpush1.bf16.msra.mxu0 0
        %1971 = vmatprep.subr.bf16.mxu0 0
        %1972 = vmatpush1.bf16.msra.mxu0 0
        %1973 = vmatprep.subr.bf16.mxu0 0
        %1974 = vmatpush1.bf16.msra.mxu0 0
        %1975 = vmatprep.subr.bf16.mxu0 0
        %1976 = vmatpush1.bf16.msra.mxu0 0
        %1977 = vmatprep.subr.bf16.mxu0 0
        %1978 = vmatpush1.bf16.msra.mxu0 0
        %1979 = vmatprep.mubr.bf16.mxu0 0
        %1980 = vmatmul.mubr.bf16.gmra.mrb[0].mxu0 %v1945
        %v1981 = vpop.f32.mrb[0].mxu0
        %v1982 = vadd.f32 %v1931, %v1981
        %v1983 = vpop.f32.mrb[0].mxu0
        %v1984 = vpop.f32.mrb[0].mxu0
        %v1985 = vpop.f32.mrb[0].mxu0
        %1986 = vdwg.mxu0
        %v1987 = vmax.f32 %v1982, 0.0
        %v1988 = vpack.c.bf16 %v1987, %v1987
        %v1989 = vlaneseq
        %v1990 = vshrl.u32 %v1989, 7
        %v1991 = vsub.s32 0, %v1990
        %v1992 = vrot.slane %v1217, %v1991
        %v2009 = vunpack.c.l.b16 %v1194
        %v2010 = vunpack.c.l.b16 %v1195
        %v2011 = vunpack.c.l.b16 %v1196
        %v2012 = vunpack.c.l.b16 %v1197
        %v2013 = vunpack.c.l.b16 %v1198
        %v2014 = vunpack.c.l.b16 %v1199
        %v2015 = vunpack.c.l.b16 %v1200
        %v2016 = vunpack.c.l.b16 %v1201
        %v2017 = vunpack.c.l.b16 %v1202
        %v2018 = vunpack.c.l.b16 %v1203
        %v2019 = vunpack.c.l.b16 %v1204
        %v2020 = vunpack.c.l.b16 %v1205
        %v2021 = vunpack.c.l.b16 %v1206
        %v2022 = vunpack.c.l.b16 %v1207
        %v2023 = vunpack.c.l.b16 %v1208
        %v2024 = vunpack.c.l.b16 %v1209
        %v2025 = vpack.c.b16 %v2010, %v2009
        %v2026 = vpack.c.b16 %v2012, %v2011
        %v2027 = vpack.c.b16 %v2014, %v2013
        %v2028 = vpack.c.b16 %v2016, %v2015
        %v2029 = vpack.c.b16 %v2018, %v2017
        %v2030 = vpack.c.b16 %v2020, %v2019
        %v2031 = vpack.c.b16 %v2022, %v2021
        %v2032 = vpack.c.b16 %v2024, %v2023
        %2041 = vmatprep.subr.bf16.mxu0 0
        %2042 = vmatpush1.bf16.msra.mxu0 %v2025
        %2043 = vmatprep.subr.bf16.mxu0 0
        %2044 = vmatpush1.bf16.msra.mxu0 %v2026
        %2045 = vmatprep.subr.bf16.mxu0 0
        %2046 = vmatpush1.bf16.msra.mxu0 %v2027
        %2047 = vmatprep.subr.bf16.mxu0 0
        %2048 = vmatpush1.bf16.msra.mxu0 %v2028
        %2049 = vmatprep.subr.bf16.mxu0 0
        %2050 = vmatpush1.bf16.msra.mxu0 %v2029
        %2051 = vmatprep.subr.bf16.mxu0 0
        %2052 = vmatpush1.bf16.msra.mxu0 %v2030
        %2053 = vmatprep.subr.bf16.mxu0 0
        %2054 = vmatpush1.bf16.msra.mxu0 %v2031
        %2055 = vmatprep.subr.bf16.mxu0 0
        %2056 = vmatpush1.bf16.msra.mxu0 %v2032
        %2057 = vmatprep.subr.bf16.mxu0 0
        %2058 = vmatpush1.bf16.msra.mxu0 0
        %2059 = vmatprep.subr.bf16.mxu0 0
        %2060 = vmatpush1.bf16.msra.mxu0 0
        %2061 = vmatprep.subr.bf16.mxu0 0
        %2062 = vmatpush1.bf16.msra.mxu0 0
        %2063 = vmatprep.subr.bf16.mxu0 0
        %2064 = vmatpush1.bf16.msra.mxu0 0
        %2065 = vmatprep.subr.bf16.mxu0 0
        %2066 = vmatpush1.bf16.msra.mxu0 0
        %2067 = vmatprep.subr.bf16.mxu0 0
        %2068 = vmatpush1.bf16.msra.mxu0 0
        %2069 = vmatprep.subr.bf16.mxu0 0
        %2070 = vmatpush1.bf16.msra.mxu0 0
        %2071 = vmatprep.subr.bf16.mxu0 0
        %2072 = vmatpush1.bf16.msra.mxu0 0
        %2073 = vmatprep.mubr.bf16.mxu0 0
        %2074 = vmatmul.mubr.bf16.gmra.mrb[0].mxu0 %v1988
        %v2075 = vpop.f32.mrb[0].mxu0
        %v2076 = vadd.f32 %v1992, %v2075
        %v2077 = vpop.f32.mrb[0].mxu0
        %v2078 = vpop.f32.mrb[0].mxu0
        %v2079 = vpop.f32.mrb[0].mxu0
        %2080 = vdwg.mxu0
        %v2081 = vadd.f32 %v1926, %v2076
        %v2082 = vsel %vm295, %v2081, 0.0
        %2083 = vadd.xlane.f32.xlu0 %v2082
        %v2084 = vpop.xlane.xlu0 %2083
        %v2085 = vmul.f32 %v2084, %v975
        %v2086 = vsub.f32 %v2081, %v2085
        %v2087 = vmul.f32 %v2086, %v2086
        %v2088 = vsel %vm295, %v2087, 0.0
        %2089 = vadd.xlane.f32.xlu0 %v2088
        %v2090 = vpop.xlane.xlu0 %2089
        %v2091 = vmul.f32 %v2090, %v975
        %v2092 = vadd.f32 %v2091, 1e-05
        %v2093 = vrsqrt.pop %v2092
        %v2094 = vmul.f32 %v2086, %v2093
        %v2095 = vlaneseq
        %v2096 = vshrl.u32 %v2095, 7
        %v2097 = vsub.s32 0, %v2096
        %v2098 = vrot.slane %v1218, %v2097
        %v2099 = vmul.f32 %v2094, %v2098
        %v2100 = vlaneseq
        %v2101 = vshrl.u32 %v2100, 7
        %v2102 = vsub.s32 0, %v2101
        %v2103 = vrot.slane %v1219, %v2102
        %v2104 = vadd.f32 %v2099, %v2103
        %2105 = vst.msk [vmem:[%s214] sm:$0xff] %vm295, %v2104
        %s2106 = sand.u32 %s97, 1
        %s2107 = scalar_lea.sflag [#allocation4], %s2106
        %s2108 = sand.u32 %s97, 1
        %s2109 = smul.addr %s2108, 8
        %s2110 = scalar_lea.vmem [#allocation8], %s2109
        // Predicated region
        $region45: #{tpu_custom_call.1} parent=31 // pred_check
          %p2111 = pneg %p107
        $region46: #{tpu_custom_call.1} parent=31 // pred_check_branch
          %2113 = sbr.rel (%p2111) target = $region48
        $region47: #{tpu_custom_call.1} parent=31 // pred_region
          %s2115 = ssub.s32 128, 128
          %2116 = vsyncadd %s2107, %s2115
          %s2117 = smul.addr %s21, 128
          %s2118 = scalar_lea.hbm %s3, %s2117
          %s2120 = sshll.u32 %s2110, 4
          %s2121 = int_to_ptr.vmem [resolvable:$true] %s2120
          %2123 = dma.vmem_to_hbm [thread:$0]  %s2121, 128, %s2118, %s2107
        $region48: #{tpu_custom_call.1} parent=31 // pred_fallthru
          _
      $region32: #{tpu_custom_call.1} parent=5 // pred_fallthru
        _
      %p2124 = scmp.le.s32.totalorder 2, %s16
      // Predicated region
      $region49: #{tpu_custom_call.1} parent=5 // pred_check
        %p2125 = pneg %p2124
      $region50: #{tpu_custom_call.1} parent=5 // pred_check_branch
        %2127 = sbr.rel (%p2125) target = $region52
      $region51: #{tpu_custom_call.1} parent=5 // pred_region
        %s2128 = ssub.s32 %s16, 2
        // Predicated region
        $region53: #{tpu_custom_call.1} parent=51 // pred_check
          %p2129 = pneg %p113
        $region54: #{tpu_custom_call.1} parent=51 // pred_check_branch
          %2131 = sbr.rel (%p2129) target = $region56
        $region55: #{tpu_custom_call.1} parent=51 // pred_region
          %s2132 = sand.u32 %s98, 1
          %s2133 = scalar_lea.sflag [#allocation4], %s2132
          %s2134 = sand.u32 %s98, 1
          %s2135 = smul.addr %s2134, 8
          %s2136 = scalar_lea.vmem [#allocation8], %s2135
          %2137 = dma.done %s2133, 128
        $region56: #{tpu_custom_call.1} parent=51 // pred_fallthru
          _
      $region52: #{tpu_custom_call.1} parent=5 // pred_fallthru
        _
    $region6: #{tpu_custom_call.1} parent=1 // loop_footer
      %s20 = sadd.s32 1, %s16
    $region7: #{tpu_custom_call.1} parent=1 // loop_footer_branch
      %15 = sbr.rel target = $region3
    $region8: #{tpu_custom_call.1} parent=1 // loop_exit
      _
    %2138 = vsyncpa [#allocation3], 1
    %s2139 = scalar_lea.sflag [#allocation3], 1
    %2140 = vsyncpa %s2139, 1
    %2141 = vsyncpa [#allocation6], 1
    %2142 = vsyncpa [#allocation4], 1
    %s2143 = scalar_lea.sflag [#allocation4], 1
    %2144 = vsyncpa %s2143, 1

</llo_original>
